<compile_context>
chip_gen: v7x
topology: tpu7x:2x2x1
jax: 0.10.0
libtpu: 0.0.40
codegen_flags: <defaults>
</compile_context>

<pallas_src>
import numpy as np
import jax
import jax.numpy as jnp
from jax.experimental import pallas as pl
from jax.experimental.pallas import tpu as pltpu

KSIZE = 7
PAD = KSIZE // 2  # 'same' padding for kernel_size=7


def _shift_minor(y, shift, length):
    """out[..., i] = y[..., (i + shift) % length]  (static shift, circular)."""
    s = shift % length
    if s == 0:
        return y
    return jnp.concatenate([y[..., s:], y[..., :s]], axis=-1)


def _pick_tiles(N, C, HW, itemsize, block_bytes):
    """Channel tile (multiple of 8 or full C), batch fold, in-kernel chunk."""
    if C * HW * itemsize <= block_bytes:
        c_tile = C
    else:
        best = None
        for cand in range(8, C, 8):                      # largest divisor <= budget
            if C % cand == 0 and cand * HW * itemsize <= block_bytes:
                best = cand
        if best is None:                                 # nothing fits: smallest x8 divisor
            for cand in range(8, C, 8):
                if C % cand == 0:
                    best = cand
                    break
        c_tile = best if best is not None else C
    num_c = C // c_tile

    # Batch fold (leading block dim, no (8,128) constraint): amortize per-step
    # overhead for small shapes.
    limit = max(block_bytes, c_tile * HW * itemsize)
    tn = 1
    for cand in range(1, N + 1):
        if N % cand == 0 and cand * c_tile * HW * itemsize <= limit:
            tn = cand
    num_n = N // tn

    # In-kernel channel chunk: stream the reduction instead of keeping the
    # whole channel block live in vregs.
    if c_tile <= 32:
        cc = c_tile
    elif c_tile % 8 == 0:
        cc = 8
    else:
        cc = c_tile
    return tn, num_n, c_tile, num_c, cc


def _make_kernel(*, C, W, HW, tn, c_tile, cc, num_c):
    def channel_partials(x_ref):
        """Streamed sum/max over the channel axis of this block -> (tn, HW) f32."""
        s_acc = m_acc = None
        c0 = 0
        while c0 < c_tile:
            sz = min(cc, c_tile - c0)
            xc = x_ref[:, pl.ds(c0, sz), :].astype(jnp.float32)   # (tn, sz, HW)
            cs = jnp.sum(xc, axis=1)
            cm = jnp.max(xc, axis=1)
            if s_acc is None:
                s_acc, m_acc = cs, cm
            else:
                s_acc = s_acc + cs
                m_acc = jnp.maximum(m_acc, cm)
            c0 += sz
        return s_acc, m_acc

    def conv_sigmoid_store(s_tot, m_tot, w_ref, rmask_ref, cmask_ref, o_ref):
        avg = s_tot * (1.0 / C)                                   # (tn, HW) f32
        mx = m_tot
        # 7 per-column-offset partial accumulators; each row-shifted map is
        # built once and consumed immediately (~9 live maps instead of ~16).
        parts = [None] * KSIZE
        for kh in range(KSIZE):
            t = kh - PAD
            if t == 0:
                a_t, m_t = avg, mx
            else:
                rmask = rmask_ref[pl.ds(kh, 1), :]                # (1, HW)
                a_t = _shift_minor(avg, t * W, HW) * rmask
                m_t = _shift_minor(mx, t * W, HW) * rmask
            for kw in range(KSIZE):
                w_a = w_ref[0 * KSIZE * KSIZE + kh * KSIZE + kw]  # SMEM scalar
                w_m = w_ref[1 * KSIZE * KSIZE + kh * KSIZE + kw]
                contrib = w_a * a_t + w_m * m_t
                parts[kw] = contrib if parts[kw] is None else parts[kw] + contrib
        acc = None
        for kw in range(KSIZE):
            s_off = kw - PAD
            if s_off == 0:
                term = parts[kw]
            else:
                cmask = cmask_ref[pl.ds(kw, 1), :]                # (1, HW)
                term = _shift_minor(parts[kw], s_off, HW) * cmask
            acc = term if acc is None else acc + term
        o_ref[...] = jax.nn.sigmoid(acc).astype(o_ref.dtype)[:, None, :]

    if num_c == 1:
        # Single pass over channels: no scratch allocation, no round-trip.
        def kernel(w_ref, rmask_ref, cmask_ref, x_ref, o_ref):
            s_tot, m_tot = channel_partials(x_ref)
            conv_sigmoid_store(s_tot, m_tot, w_ref, rmask_ref, cmask_ref, o_ref)

        scratch_shapes = []
    else:
        # Channel reduction streamed across the grid into VMEM accumulators.
        def kernel(w_ref, rmask_ref, cmask_ref, x_ref, o_ref, sum_ref, max_ref):
            k = pl.program_id(1)
            s_loc, m_loc = channel_partials(x_ref)

            @pl.when(k == 0)
            def _init():
                sum_ref[...] = jnp.zeros_like(sum_ref)
                max_ref[...] = jnp.full_like(max_ref, -jnp.inf)

            s_tot = sum_ref[...] + s_loc
            m_tot = jnp.maximum(max_ref[...], m_loc)

            @pl.when(k < num_c - 1)                    # skip write-back on last step
            def _store():
                sum_ref[...] = s_tot
                max_ref[...] = m_tot

            @pl.when(k == num_c - 1)
            def _finalize():
                conv_sigmoid_store(s_tot, m_tot, w_ref, rmask_ref, cmask_ref, o_ref)

        scratch_shapes = [pltpu.VMEM((tn, HW), jnp.float32),   # running channel sum
                          pltpu.VMEM((tn, HW), jnp.float32)]   # running channel max
    return kernel, scratch_shapes


def spatial_attention(x, weight, *, block_bytes=2 * 1024 * 1024):
    """x: (N, C, H, W); weight: (1, 2, 7, 7) conv weight (no bias)."""
    N, C, H, W = x.shape
    HW = H * W
    assert weight.shape == (1, 2, KSIZE, KSIZE)
    itemsize = jnp.dtype(x.dtype).itemsize

    tn, num_n, c_tile, num_c, cc = _pick_tiles(N, C, HW, itemsize, block_bytes)

    x_flat = x.reshape(N, C, HW)
    w_flat = weight.reshape(-1).astype(jnp.float32)              # 98 SMEM scalars

    # Precompute the 'same'-padding border masks on the host (tiny constants;
    # removes iota / compare / convert work from the kernel's finalize block).
    rows = np.arange(HW, dtype=np.int32) // W
    cols = np.arange(HW, dtype=np.int32) % W
    rmasks = np.empty((KSIZE, HW), np.float32)
    cmasks = np.empty((KSIZE, HW), np.float32)
    for kh in range(KSIZE):
        t = kh - PAD
        rmasks[kh] = ((rows >= -t) & (rows < H - t)).astype(np.float32)
    for kw in range(KSIZE):
        s = kw - PAD
        cmasks[kw] = ((cols >= -s) & (cols < W - s)).astype(np.float32)
    rmasks = jnp.asarray(rmasks)
    cmasks = jnp.asarray(cmasks)

    kernel, scratch_shapes = _make_kernel(
        C=C, W=W, HW=HW, tn=tn, c_tile=c_tile, cc=cc, num_c=num_c)

    # Conservative VMEM budget (limit only; never below the 16 MiB floor,
    # never above the smallest physical VMEM, 64 MiB on v7x).
    x_block = tn * c_tile * HW * itemsize
    out_block = tn * HW * itemsize
    mask_bytes = 2 * KSIZE * HW * 4
    scratch_bytes = (2 * tn * HW * 4) if num_c > 1 else 0
    vmem_limit = 2 * (x_block + out_block + mask_bytes) + scratch_bytes + (1 << 20)
    vmem_limit = int(min(max(vmem_limit, 16 << 20), 64 << 20))

    out = pl.pallas_call(
        kernel,
        out_shape=jax.ShapeDtypeStruct((N, 1, HW), x.dtype),
        grid_spec=pltpu.PrefetchScalarGridSpec(
            num_scalar_prefetch=0,
            grid=(num_n, num_c),
            in_specs=[
                pl.BlockSpec(memory_space=pltpu.MemorySpace.SMEM),        # weights
                pl.BlockSpec((KSIZE, HW), lambda n, k: (0, 0)),           # row masks
                pl.BlockSpec((KSIZE, HW), lambda n, k: (0, 0)),           # col masks
                pl.BlockSpec((tn, c_tile, HW), lambda n, k: (n, k, 0)),   # x
            ],
            out_specs=pl.BlockSpec((tn, 1, HW), lambda n, k: (n, 0, 0)),
            scratch_shapes=scratch_shapes,
        ),
        compiler_params=pltpu.CompilerParams(
            dimension_semantics=("parallel", "arbitrary"),
            vmem_limit_bytes=vmem_limit,
        ),
    )(w_flat, rmasks, cmasks, x_flat)

    return out.reshape(N, 1, H, W)


def _reference(x, weight):
    avg = jnp.mean(x, axis=1, keepdims=True)
    mx = jnp.max(x, axis=1, keepdims=True)
    cat = jnp.concatenate([avg, mx], axis=1)
    conv = jax.lax.conv_general_dilated(
        cat, weight, window_strides=(1, 1),
        padding=[(PAD, PAD), (PAD, PAD)],
        dimension_numbers=("NCHW", "OIHW", "NCHW"),
        precision=jax.lax.Precision.HIGHEST)
    return jax.nn.sigmoid(conv)


if __name__ == "__main__":
    key = jax.random.PRNGKey(0)
    kx, kw, kx2 = jax.random.split(key, 3)

    # Deterministic init matching nn.Conv2d(2, 1, 7, bias=False) default:
    # U(-b, b) with b = 1 / sqrt(fan_in), fan_in = 2 * 7 * 7.
    fan_in = 2 * KSIZE * KSIZE
    bound = 1.0 / (fan_in ** 0.5)
    weight = jax.random.uniform(kw, (1, 2, KSIZE, KSIZE), jnp.float32,
                                minval=-bound, maxval=bound)

    # Config 1: single channel-tile path (C fits in one block, no scratch).
    N, C, H, W = 2, 4, 16, 16
    x = jax.random.normal(kx, (N, C, H, W), dtype=jnp.float32)
    out = jax.block_until_ready(spatial_attention(x, weight))
    ref = _reference(x, weight)
    assert out.shape == (N, 1, H, W)
    assert jnp.allclose(out, ref, atol=1e-5, rtol=1e-5)

    # Config 2: channel-tiled path (grid reduces over C into VMEM scratch).
    N2, C2, H2, W2 = 2, 32, 8, 8
    x2 = jax.random.normal(kx2, (N2, C2, H2, W2), dtype=jnp.float32)
    out2 = jax.block_until_ready(
        spatial_attention(x2, weight, block_bytes=8 * H2 * W2 * 4))
    ref2 = _reference(x2, weight)
    assert out2.shape == (N2, 1, H2, W2)
    assert jnp.allclose(out2, ref2, atol=1e-5, rtol=1e-5)

    print("KERNEL_OK")
</pallas_src>

<mosaic_0001>
module attributes {stable_mosaic.version = 11 : i64} {
  func.func @kernel(%arg0: i32, %arg1: i32, %arg2: memref<98xf32, #tpu.memory_space<smem>>, %arg3: memref<7x256xf32, #tpu.memory_space<vmem>>, %arg4: memref<7x256xf32, #tpu.memory_space<vmem>>, %arg5: memref<2x4x256xf32, #tpu.memory_space<vmem>>, %arg6: memref<2x1x256xf32, #tpu.memory_space<vmem>>) attributes {dimension_semantics = [#tpu.dimension_semantics<parallel>, #tpu.dimension_semantics<arbitrary>], iteration_bounds = array<i64: 1, 1>, scalar_prefetch = 0 : i64, scratch_operands = 0 : i64, tpu.core_type = #tpu.core_type<tc>, window_params = [{transform_indices = @transform_0, window_bounds = array<i64: 98>}, {pipeline_mode = #tpu.pipeline_mode<synchronous>, transform_indices = @transform_1, window_bounds = array<i64: 7, 256>}, {pipeline_mode = #tpu.pipeline_mode<synchronous>, transform_indices = @transform_2, window_bounds = array<i64: 7, 256>}, {transform_indices = @transform_3, window_bounds = array<i64: 2, 4, 256>}, {transform_indices = @transform_4, window_bounds = array<i64: 2, 1, 256>}]} {
    %c0 = arith.constant 0 : index
    %c0_0 = arith.constant 0 : index
    %c0_1 = arith.constant 0 : index
    %0 = vector.load %arg5[%c0, %c0_0, %c0_1] : memref<2x4x256xf32, #tpu.memory_space<vmem>>, vector<2x4x256xf32>
    %cst = arith.constant dense<0.000000e+00> : vector<2x256xf32>
    %1 = vector.multi_reduction <add>, %0, %cst [1] : vector<2x4x256xf32> to vector<2x256xf32>
    %cst_2 = arith.constant dense<0xFF800000> : vector<2x256xf32>
    %2 = vector.multi_reduction <maximumf>, %0, %cst_2 [1] : vector<2x4x256xf32> to vector<2x256xf32>
    %cst_3 = arith.constant 2.500000e-01 : f32
    %3 = vector.broadcast %cst_3 : f32 to vector<2x256xf32>
    %4 = arith.mulf %1, %3 : vector<2x256xf32>
    %c0_4 = arith.constant 0 : index
    %c0_5 = arith.constant 0 : index
    %5 = vector.load %arg3[%c0_4, %c0_5] : memref<7x256xf32, #tpu.memory_space<vmem>>, vector<1x256xf32>
    %6 = vector.extract_strided_slice %4 {offsets = [0, 208], sizes = [2, 48], strides = [1, 1]} : vector<2x256xf32> to vector<2x48xf32>
    %7 = vector.extract_strided_slice %4 {offsets = [0, 0], sizes = [2, 208], strides = [1, 1]} : vector<2x256xf32> to vector<2x208xf32>
    %8 = tpu.concatenate %6, %7 in 1 : vector<2x48xf32>, vector<2x208xf32> -> vector<2x256xf32>
    %9 = vector.broadcast %5 : vector<1x256xf32> to vector<2x256xf32>
    %10 = arith.mulf %8, %9 : vector<2x256xf32>
    %11 = vector.extract_strided_slice %2 {offsets = [0, 208], sizes = [2, 48], strides = [1, 1]} : vector<2x256xf32> to vector<2x48xf32>
    %12 = vector.extract_strided_slice %2 {offsets = [0, 0], sizes = [2, 208], strides = [1, 1]} : vector<2x256xf32> to vector<2x208xf32>
    %13 = tpu.concatenate %11, %12 in 1 : vector<2x48xf32>, vector<2x208xf32> -> vector<2x256xf32>
    %14 = vector.broadcast %5 : vector<1x256xf32> to vector<2x256xf32>
    %15 = arith.mulf %13, %14 : vector<2x256xf32>
    %c0_6 = arith.constant 0 : index
    %16 = memref.load %arg2[%c0_6] : memref<98xf32, #tpu.memory_space<smem>>
    %c49 = arith.constant 49 : index
    %17 = memref.load %arg2[%c49] : memref<98xf32, #tpu.memory_space<smem>>
    %18 = vector.broadcast %16 : f32 to vector<2x256xf32>
    %19 = arith.mulf %18, %10 : vector<2x256xf32>
    %20 = vector.broadcast %17 : f32 to vector<2x256xf32>
    %21 = arith.mulf %20, %15 : vector<2x256xf32>
    %22 = arith.addf %19, %21 : vector<2x256xf32>
    %c1 = arith.constant 1 : index
    %23 = memref.load %arg2[%c1] : memref<98xf32, #tpu.memory_space<smem>>
    %c50 = arith.constant 50 : index
    %24 = memref.load %arg2[%c50] : memref<98xf32, #tpu.memory_space<smem>>
    %25 = vector.broadcast %23 : f32 to vector<2x256xf32>
    %26 = arith.mulf %25, %10 : vector<2x256xf32>
    %27 = vector.broadcast %24 : f32 to vector<2x256xf32>
    %28 = arith.mulf %27, %15 : vector<2x256xf32>
    %29 = arith.addf %26, %28 : vector<2x256xf32>
    %c2 = arith.constant 2 : index
    %30 = memref.load %arg2[%c2] : memref<98xf32, #tpu.memory_space<smem>>
    %c51 = arith.constant 51 : index
    %31 = memref.load %arg2[%c51] : memref<98xf32, #tpu.memory_space<smem>>
    %32 = vector.broadcast %30 : f32 to vector<2x256xf32>
    %33 = arith.mulf %32, %10 : vector<2x256xf32>
    %34 = vector.broadcast %31 : f32 to vector<2x256xf32>
    %35 = arith.mulf %34, %15 : vector<2x256xf32>
    %36 = arith.addf %33, %35 : vector<2x256xf32>
    %c3 = arith.constant 3 : index
    %37 = memref.load %arg2[%c3] : memref<98xf32, #tpu.memory_space<smem>>
    %c52 = arith.constant 52 : index
    %38 = memref.load %arg2[%c52] : memref<98xf32, #tpu.memory_space<smem>>
    %39 = vector.broadcast %37 : f32 to vector<2x256xf32>
    %40 = arith.mulf %39, %10 : vector<2x256xf32>
    %41 = vector.broadcast %38 : f32 to vector<2x256xf32>
    %42 = arith.mulf %41, %15 : vector<2x256xf32>
    %43 = arith.addf %40, %42 : vector<2x256xf32>
    %c4 = arith.constant 4 : index
    %44 = memref.load %arg2[%c4] : memref<98xf32, #tpu.memory_space<smem>>
    %c53 = arith.constant 53 : index
    %45 = memref.load %arg2[%c53] : memref<98xf32, #tpu.memory_space<smem>>
    %46 = vector.broadcast %44 : f32 to vector<2x256xf32>
    %47 = arith.mulf %46, %10 : vector<2x256xf32>
    %48 = vector.broadcast %45 : f32 to vector<2x256xf32>
    %49 = arith.mulf %48, %15 : vector<2x256xf32>
    %50 = arith.addf %47, %49 : vector<2x256xf32>
    %c5 = arith.constant 5 : index
    %51 = memref.load %arg2[%c5] : memref<98xf32, #tpu.memory_space<smem>>
    %c54 = arith.constant 54 : index
    %52 = memref.load %arg2[%c54] : memref<98xf32, #tpu.memory_space<smem>>
    %53 = vector.broadcast %51 : f32 to vector<2x256xf32>
    %54 = arith.mulf %53, %10 : vector<2x256xf32>
    %55 = vector.broadcast %52 : f32 to vector<2x256xf32>
    %56 = arith.mulf %55, %15 : vector<2x256xf32>
    %57 = arith.addf %54, %56 : vector<2x256xf32>
    %c6 = arith.constant 6 : index
    %58 = memref.load %arg2[%c6] : memref<98xf32, #tpu.memory_space<smem>>
    %c55 = arith.constant 55 : index
    %59 = memref.load %arg2[%c55] : memref<98xf32, #tpu.memory_space<smem>>
    %60 = vector.broadcast %58 : f32 to vector<2x256xf32>
    %61 = arith.mulf %60, %10 : vector<2x256xf32>
    %62 = vector.broadcast %59 : f32 to vector<2x256xf32>
    %63 = arith.mulf %62, %15 : vector<2x256xf32>
    %64 = arith.addf %61, %63 : vector<2x256xf32>
    %c1_7 = arith.constant 1 : index
    %c0_8 = arith.constant 0 : index
    %65 = vector.load %arg3[%c1_7, %c0_8] : memref<7x256xf32, #tpu.memory_space<vmem>>, vector<1x256xf32>
    %66 = vector.extract_strided_slice %4 {offsets = [0, 224], sizes = [2, 32], strides = [1, 1]} : vector<2x256xf32> to vector<2x32xf32>
    %67 = vector.extract_strided_slice %4 {offsets = [0, 0], sizes = [2, 224], strides = [1, 1]} : vector<2x256xf32> to vector<2x224xf32>
    %68 = tpu.concatenate %66, %67 in 1 : vector<2x32xf32>, vector<2x224xf32> -> vector<2x256xf32>
    %69 = vector.broadcast %65 : vector<1x256xf32> to vector<2x256xf32>
    %70 = arith.mulf %68, %69 : vector<2x256xf32>
    %71 = vector.extract_strided_slice %2 {offsets = [0, 224], sizes = [2, 32], strides = [1, 1]} : vector<2x256xf32> to vector<2x32xf32>
    %72 = vector.extract_strided_slice %2 {offsets = [0, 0], sizes = [2, 224], strides = [1, 1]} : vector<2x256xf32> to vector<2x224xf32>
    %73 = tpu.concatenate %71, %72 in 1 : vector<2x32xf32>, vector<2x224xf32> -> vector<2x256xf32>
    %74 = vector.broadcast %65 : vector<1x256xf32> to vector<2x256xf32>
    %75 = arith.mulf %73, %74 : vector<2x256xf32>
    %c7 = arith.constant 7 : index
    %76 = memref.load %arg2[%c7] : memref<98xf32, #tpu.memory_space<smem>>
    %c56 = arith.constant 56 : index
    %77 = memref.load %arg2[%c56] : memref<98xf32, #tpu.memory_space<smem>>
    %78 = vector.broadcast %76 : f32 to vector<2x256xf32>
    %79 = arith.mulf %78, %70 : vector<2x256xf32>
    %80 = vector.broadcast %77 : f32 to vector<2x256xf32>
    %81 = arith.mulf %80, %75 : vector<2x256xf32>
    %82 = arith.addf %79, %81 : vector<2x256xf32>
    %83 = arith.addf %22, %82 : vector<2x256xf32>
    %c8 = arith.constant 8 : index
    %84 = memref.load %arg2[%c8] : memref<98xf32, #tpu.memory_space<smem>>
    %c57 = arith.constant 57 : index
    %85 = memref.load %arg2[%c57] : memref<98xf32, #tpu.memory_space<smem>>
    %86 = vector.broadcast %84 : f32 to vector<2x256xf32>
    %87 = arith.mulf %86, %70 : vector<2x256xf32>
    %88 = vector.broadcast %85 : f32 to vector<2x256xf32>
    %89 = arith.mulf %88, %75 : vector<2x256xf32>
    %90 = arith.addf %87, %89 : vector<2x256xf32>
    %91 = arith.addf %29, %90 : vector<2x256xf32>
    %c9 = arith.constant 9 : index
    %92 = memref.load %arg2[%c9] : memref<98xf32, #tpu.memory_space<smem>>
    %c58 = arith.constant 58 : index
    %93 = memref.load %arg2[%c58] : memref<98xf32, #tpu.memory_space<smem>>
    %94 = vector.broadcast %92 : f32 to vector<2x256xf32>
    %95 = arith.mulf %94, %70 : vector<2x256xf32>
    %96 = vector.broadcast %93 : f32 to vector<2x256xf32>
    %97 = arith.mulf %96, %75 : vector<2x256xf32>
    %98 = arith.addf %95, %97 : vector<2x256xf32>
    %99 = arith.addf %36, %98 : vector<2x256xf32>
    %c10 = arith.constant 10 : index
    %100 = memref.load %arg2[%c10] : memref<98xf32, #tpu.memory_space<smem>>
    %c59 = arith.constant 59 : index
    %101 = memref.load %arg2[%c59] : memref<98xf32, #tpu.memory_space<smem>>
    %102 = vector.broadcast %100 : f32 to vector<2x256xf32>
    %103 = arith.mulf %102, %70 : vector<2x256xf32>
    %104 = vector.broadcast %101 : f32 to vector<2x256xf32>
    %105 = arith.mulf %104, %75 : vector<2x256xf32>
    %106 = arith.addf %103, %105 : vector<2x256xf32>
    %107 = arith.addf %43, %106 : vector<2x256xf32>
    %c11 = arith.constant 11 : index
    %108 = memref.load %arg2[%c11] : memref<98xf32, #tpu.memory_space<smem>>
    %c60 = arith.constant 60 : index
    %109 = memref.load %arg2[%c60] : memref<98xf32, #tpu.memory_space<smem>>
    %110 = vector.broadcast %108 : f32 to vector<2x256xf32>
    %111 = arith.mulf %110, %70 : vector<2x256xf32>
    %112 = vector.broadcast %109 : f32 to vector<2x256xf32>
    %113 = arith.mulf %112, %75 : vector<2x256xf32>
    %114 = arith.addf %111, %113 : vector<2x256xf32>
    %115 = arith.addf %50, %114 : vector<2x256xf32>
    %c12 = arith.constant 12 : index
    %116 = memref.load %arg2[%c12] : memref<98xf32, #tpu.memory_space<smem>>
    %c61 = arith.constant 61 : index
    %117 = memref.load %arg2[%c61] : memref<98xf32, #tpu.memory_space<smem>>
    %118 = vector.broadcast %116 : f32 to vector<2x256xf32>
    %119 = arith.mulf %118, %70 : vector<2x256xf32>
    %120 = vector.broadcast %117 : f32 to vector<2x256xf32>
    %121 = arith.mulf %120, %75 : vector<2x256xf32>
    %122 = arith.addf %119, %121 : vector<2x256xf32>
    %123 = arith.addf %57, %122 : vector<2x256xf32>
    %c13 = arith.constant 13 : index
    %124 = memref.load %arg2[%c13] : memref<98xf32, #tpu.memory_space<smem>>
    %c62 = arith.constant 62 : index
    %125 = memref.load %arg2[%c62] : memref<98xf32, #tpu.memory_space<smem>>
    %126 = vector.broadcast %124 : f32 to vector<2x256xf32>
    %127 = arith.mulf %126, %70 : vector<2x256xf32>
    %128 = vector.broadcast %125 : f32 to vector<2x256xf32>
    %129 = arith.mulf %128, %75 : vector<2x256xf32>
    %130 = arith.addf %127, %129 : vector<2x256xf32>
    %131 = arith.addf %64, %130 : vector<2x256xf32>
    %c2_9 = arith.constant 2 : index
    %c0_10 = arith.constant 0 : index
    %132 = vector.load %arg3[%c2_9, %c0_10] : memref<7x256xf32, #tpu.memory_space<vmem>>, vector<1x256xf32>
    %133 = vector.extract_strided_slice %4 {offsets = [0, 240], sizes = [2, 16], strides = [1, 1]} : vector<2x256xf32> to vector<2x16xf32>
    %134 = vector.extract_strided_slice %4 {offsets = [0, 0], sizes = [2, 240], strides = [1, 1]} : vector<2x256xf32> to vector<2x240xf32>
    %135 = tpu.concatenate %133, %134 in 1 : vector<2x16xf32>, vector<2x240xf32> -> vector<2x256xf32>
    %136 = vector.broadcast %132 : vector<1x256xf32> to vector<2x256xf32>
    %137 = arith.mulf %135, %136 : vector<2x256xf32>
    %138 = vector.extract_strided_slice %2 {offsets = [0, 240], sizes = [2, 16], strides = [1, 1]} : vector<2x256xf32> to vector<2x16xf32>
    %139 = vector.extract_strided_slice %2 {offsets = [0, 0], sizes = [2, 240], strides = [1, 1]} : vector<2x256xf32> to vector<2x240xf32>
    %140 = tpu.concatenate %138, %139 in 1 : vector<2x16xf32>, vector<2x240xf32> -> vector<2x256xf32>
    %141 = vector.broadcast %132 : vector<1x256xf32> to vector<2x256xf32>
    %142 = arith.mulf %140, %141 : vector<2x256xf32>
    %c14 = arith.constant 14 : index
    %143 = memref.load %arg2[%c14] : memref<98xf32, #tpu.memory_space<smem>>
    %c63 = arith.constant 63 : index
    %144 = memref.load %arg2[%c63] : memref<98xf32, #tpu.memory_space<smem>>
    %145 = vector.broadcast %143 : f32 to vector<2x256xf32>
    %146 = arith.mulf %145, %137 : vector<2x256xf32>
    %147 = vector.broadcast %144 : f32 to vector<2x256xf32>
    %148 = arith.mulf %147, %142 : vector<2x256xf32>
    %149 = arith.addf %146, %148 : vector<2x256xf32>
    %150 = arith.addf %83, %149 : vector<2x256xf32>
    %c15 = arith.constant 15 : index
    %151 = memref.load %arg2[%c15] : memref<98xf32, #tpu.memory_space<smem>>
    %c64 = arith.constant 64 : index
    %152 = memref.load %arg2[%c64] : memref<98xf32, #tpu.memory_space<smem>>
    %153 = vector.broadcast %151 : f32 to vector<2x256xf32>
    %154 = arith.mulf %153, %137 : vector<2x256xf32>
    %155 = vector.broadcast %152 : f32 to vector<2x256xf32>
    %156 = arith.mulf %155, %142 : vector<2x256xf32>
    %157 = arith.addf %154, %156 : vector<2x256xf32>
    %158 = arith.addf %91, %157 : vector<2x256xf32>
    %c16 = arith.constant 16 : index
    %159 = memref.load %arg2[%c16] : memref<98xf32, #tpu.memory_space<smem>>
    %c65 = arith.constant 65 : index
    %160 = memref.load %arg2[%c65] : memref<98xf32, #tpu.memory_space<smem>>
    %161 = vector.broadcast %159 : f32 to vector<2x256xf32>
    %162 = arith.mulf %161, %137 : vector<2x256xf32>
    %163 = vector.broadcast %160 : f32 to vector<2x256xf32>
    %164 = arith.mulf %163, %142 : vector<2x256xf32>
    %165 = arith.addf %162, %164 : vector<2x256xf32>
    %166 = arith.addf %99, %165 : vector<2x256xf32>
    %c17 = arith.constant 17 : index
    %167 = memref.load %arg2[%c17] : memref<98xf32, #tpu.memory_space<smem>>
    %c66 = arith.constant 66 : index
    %168 = memref.load %arg2[%c66] : memref<98xf32, #tpu.memory_space<smem>>
    %169 = vector.broadcast %167 : f32 to vector<2x256xf32>
    %170 = arith.mulf %169, %137 : vector<2x256xf32>
    %171 = vector.broadcast %168 : f32 to vector<2x256xf32>
    %172 = arith.mulf %171, %142 : vector<2x256xf32>
    %173 = arith.addf %170, %172 : vector<2x256xf32>
    %174 = arith.addf %107, %173 : vector<2x256xf32>
    %c18 = arith.constant 18 : index
    %175 = memref.load %arg2[%c18] : memref<98xf32, #tpu.memory_space<smem>>
    %c67 = arith.constant 67 : index
    %176 = memref.load %arg2[%c67] : memref<98xf32, #tpu.memory_space<smem>>
    %177 = vector.broadcast %175 : f32 to vector<2x256xf32>
    %178 = arith.mulf %177, %137 : vector<2x256xf32>
    %179 = vector.broadcast %176 : f32 to vector<2x256xf32>
    %180 = arith.mulf %179, %142 : vector<2x256xf32>
    %181 = arith.addf %178, %180 : vector<2x256xf32>
    %182 = arith.addf %115, %181 : vector<2x256xf32>
    %c19 = arith.constant 19 : index
    %183 = memref.load %arg2[%c19] : memref<98xf32, #tpu.memory_space<smem>>
    %c68 = arith.constant 68 : index
    %184 = memref.load %arg2[%c68] : memref<98xf32, #tpu.memory_space<smem>>
    %185 = vector.broadcast %183 : f32 to vector<2x256xf32>
    %186 = arith.mulf %185, %137 : vector<2x256xf32>
    %187 = vector.broadcast %184 : f32 to vector<2x256xf32>
    %188 = arith.mulf %187, %142 : vector<2x256xf32>
    %189 = arith.addf %186, %188 : vector<2x256xf32>
    %190 = arith.addf %123, %189 : vector<2x256xf32>
    %c20 = arith.constant 20 : index
    %191 = memref.load %arg2[%c20] : memref<98xf32, #tpu.memory_space<smem>>
    %c69 = arith.constant 69 : index
    %192 = memref.load %arg2[%c69] : memref<98xf32, #tpu.memory_space<smem>>
    %193 = vector.broadcast %191 : f32 to vector<2x256xf32>
    %194 = arith.mulf %193, %137 : vector<2x256xf32>
    %195 = vector.broadcast %192 : f32 to vector<2x256xf32>
    %196 = arith.mulf %195, %142 : vector<2x256xf32>
    %197 = arith.addf %194, %196 : vector<2x256xf32>
    %198 = arith.addf %131, %197 : vector<2x256xf32>
    %c21 = arith.constant 21 : index
    %199 = memref.load %arg2[%c21] : memref<98xf32, #tpu.memory_space<smem>>
    %c70 = arith.constant 70 : index
    %200 = memref.load %arg2[%c70] : memref<98xf32, #tpu.memory_space<smem>>
    %201 = vector.broadcast %199 : f32 to vector<2x256xf32>
    %202 = arith.mulf %201, %4 : vector<2x256xf32>
    %203 = vector.broadcast %200 : f32 to vector<2x256xf32>
    %204 = arith.mulf %203, %2 : vector<2x256xf32>
    %205 = arith.addf %202, %204 : vector<2x256xf32>
    %206 = arith.addf %150, %205 : vector<2x256xf32>
    %c22 = arith.constant 22 : index
    %207 = memref.load %arg2[%c22] : memref<98xf32, #tpu.memory_space<smem>>
    %c71 = arith.constant 71 : index
    %208 = memref.load %arg2[%c71] : memref<98xf32, #tpu.memory_space<smem>>
    %209 = vector.broadcast %207 : f32 to vector<2x256xf32>
    %210 = arith.mulf %209, %4 : vector<2x256xf32>
    %211 = vector.broadcast %208 : f32 to vector<2x256xf32>
    %212 = arith.mulf %211, %2 : vector<2x256xf32>
    %213 = arith.addf %210, %212 : vector<2x256xf32>
    %214 = arith.addf %158, %213 : vector<2x256xf32>
    %c23 = arith.constant 23 : index
    %215 = memref.load %arg2[%c23] : memref<98xf32, #tpu.memory_space<smem>>
    %c72 = arith.constant 72 : index
    %216 = memref.load %arg2[%c72] : memref<98xf32, #tpu.memory_space<smem>>
    %217 = vector.broadcast %215 : f32 to vector<2x256xf32>
    %218 = arith.mulf %217, %4 : vector<2x256xf32>
    %219 = vector.broadcast %216 : f32 to vector<2x256xf32>
    %220 = arith.mulf %219, %2 : vector<2x256xf32>
    %221 = arith.addf %218, %220 : vector<2x256xf32>
    %222 = arith.addf %166, %221 : vector<2x256xf32>
    %c24 = arith.constant 24 : index
    %223 = memref.load %arg2[%c24] : memref<98xf32, #tpu.memory_space<smem>>
    %c73 = arith.constant 73 : index
    %224 = memref.load %arg2[%c73] : memref<98xf32, #tpu.memory_space<smem>>
    %225 = vector.broadcast %223 : f32 to vector<2x256xf32>
    %226 = arith.mulf %225, %4 : vector<2x256xf32>
    %227 = vector.broadcast %224 : f32 to vector<2x256xf32>
    %228 = arith.mulf %227, %2 : vector<2x256xf32>
    %229 = arith.addf %226, %228 : vector<2x256xf32>
    %230 = arith.addf %174, %229 : vector<2x256xf32>
    %c25 = arith.constant 25 : index
    %231 = memref.load %arg2[%c25] : memref<98xf32, #tpu.memory_space<smem>>
    %c74 = arith.constant 74 : index
    %232 = memref.load %arg2[%c74] : memref<98xf32, #tpu.memory_space<smem>>
    %233 = vector.broadcast %231 : f32 to vector<2x256xf32>
    %234 = arith.mulf %233, %4 : vector<2x256xf32>
    %235 = vector.broadcast %232 : f32 to vector<2x256xf32>
    %236 = arith.mulf %235, %2 : vector<2x256xf32>
    %237 = arith.addf %234, %236 : vector<2x256xf32>
    %238 = arith.addf %182, %237 : vector<2x256xf32>
    %c26 = arith.constant 26 : index
    %239 = memref.load %arg2[%c26] : memref<98xf32, #tpu.memory_space<smem>>
    %c75 = arith.constant 75 : index
    %240 = memref.load %arg2[%c75] : memref<98xf32, #tpu.memory_space<smem>>
    %241 = vector.broadcast %239 : f32 to vector<2x256xf32>
    %242 = arith.mulf %241, %4 : vector<2x256xf32>
    %243 = vector.broadcast %240 : f32 to vector<2x256xf32>
    %244 = arith.mulf %243, %2 : vector<2x256xf32>
    %245 = arith.addf %242, %244 : vector<2x256xf32>
    %246 = arith.addf %190, %245 : vector<2x256xf32>
    %c27 = arith.constant 27 : index
    %247 = memref.load %arg2[%c27] : memref<98xf32, #tpu.memory_space<smem>>
    %c76 = arith.constant 76 : index
    %248 = memref.load %arg2[%c76] : memref<98xf32, #tpu.memory_space<smem>>
    %249 = vector.broadcast %247 : f32 to vector<2x256xf32>
    %250 = arith.mulf %249, %4 : vector<2x256xf32>
    %251 = vector.broadcast %248 : f32 to vector<2x256xf32>
    %252 = arith.mulf %251, %2 : vector<2x256xf32>
    %253 = arith.addf %250, %252 : vector<2x256xf32>
    %254 = arith.addf %198, %253 : vector<2x256xf32>
    %c4_11 = arith.constant 4 : index
    %c0_12 = arith.constant 0 : index
    %255 = vector.load %arg3[%c4_11, %c0_12] : memref<7x256xf32, #tpu.memory_space<vmem>>, vector<1x256xf32>
    %256 = vector.extract_strided_slice %4 {offsets = [0, 16], sizes = [2, 240], strides = [1, 1]} : vector<2x256xf32> to vector<2x240xf32>
    %257 = vector.extract_strided_slice %4 {offsets = [0, 0], sizes = [2, 16], strides = [1, 1]} : vector<2x256xf32> to vector<2x16xf32>
    %258 = tpu.concatenate %256, %257 in 1 : vector<2x240xf32>, vector<2x16xf32> -> vector<2x256xf32>
    %259 = vector.broadcast %255 : vector<1x256xf32> to vector<2x256xf32>
    %260 = arith.mulf %258, %259 : vector<2x256xf32>
    %261 = vector.extract_strided_slice %2 {offsets = [0, 16], sizes = [2, 240], strides = [1, 1]} : vector<2x256xf32> to vector<2x240xf32>
    %262 = vector.extract_strided_slice %2 {offsets = [0, 0], sizes = [2, 16], strides = [1, 1]} : vector<2x256xf32> to vector<2x16xf32>
    %263 = tpu.concatenate %261, %262 in 1 : vector<2x240xf32>, vector<2x16xf32> -> vector<2x256xf32>
    %264 = vector.broadcast %255 : vector<1x256xf32> to vector<2x256xf32>
    %265 = arith.mulf %263, %264 : vector<2x256xf32>
    %c28 = arith.constant 28 : index
    %266 = memref.load %arg2[%c28] : memref<98xf32, #tpu.memory_space<smem>>
    %c77 = arith.constant 77 : index
    %267 = memref.load %arg2[%c77] : memref<98xf32, #tpu.memory_space<smem>>
    %268 = vector.broadcast %266 : f32 to vector<2x256xf32>
    %269 = arith.mulf %268, %260 : vector<2x256xf32>
    %270 = vector.broadcast %267 : f32 to vector<2x256xf32>
    %271 = arith.mulf %270, %265 : vector<2x256xf32>
    %272 = arith.addf %269, %271 : vector<2x256xf32>
    %273 = arith.addf %206, %272 : vector<2x256xf32>
    %c29 = arith.constant 29 : index
    %274 = memref.load %arg2[%c29] : memref<98xf32, #tpu.memory_space<smem>>
    %c78 = arith.constant 78 : index
    %275 = memref.load %arg2[%c78] : memref<98xf32, #tpu.memory_space<smem>>
    %276 = vector.broadcast %274 : f32 to vector<2x256xf32>
    %277 = arith.mulf %276, %260 : vector<2x256xf32>
    %278 = vector.broadcast %275 : f32 to vector<2x256xf32>
    %279 = arith.mulf %278, %265 : vector<2x256xf32>
    %280 = arith.addf %277, %279 : vector<2x256xf32>
    %281 = arith.addf %214, %280 : vector<2x256xf32>
    %c30 = arith.constant 30 : index
    %282 = memref.load %arg2[%c30] : memref<98xf32, #tpu.memory_space<smem>>
    %c79 = arith.constant 79 : index
    %283 = memref.load %arg2[%c79] : memref<98xf32, #tpu.memory_space<smem>>
    %284 = vector.broadcast %282 : f32 to vector<2x256xf32>
    %285 = arith.mulf %284, %260 : vector<2x256xf32>
    %286 = vector.broadcast %283 : f32 to vector<2x256xf32>
    %287 = arith.mulf %286, %265 : vector<2x256xf32>
    %288 = arith.addf %285, %287 : vector<2x256xf32>
    %289 = arith.addf %222, %288 : vector<2x256xf32>
    %c31 = arith.constant 31 : index
    %290 = memref.load %arg2[%c31] : memref<98xf32, #tpu.memory_space<smem>>
    %c80 = arith.constant 80 : index
    %291 = memref.load %arg2[%c80] : memref<98xf32, #tpu.memory_space<smem>>
    %292 = vector.broadcast %290 : f32 to vector<2x256xf32>
    %293 = arith.mulf %292, %260 : vector<2x256xf32>
    %294 = vector.broadcast %291 : f32 to vector<2x256xf32>
    %295 = arith.mulf %294, %265 : vector<2x256xf32>
    %296 = arith.addf %293, %295 : vector<2x256xf32>
    %297 = arith.addf %230, %296 : vector<2x256xf32>
    %c32 = arith.constant 32 : index
    %298 = memref.load %arg2[%c32] : memref<98xf32, #tpu.memory_space<smem>>
    %c81 = arith.constant 81 : index
    %299 = memref.load %arg2[%c81] : memref<98xf32, #tpu.memory_space<smem>>
    %300 = vector.broadcast %298 : f32 to vector<2x256xf32>
    %301 = arith.mulf %300, %260 : vector<2x256xf32>
    %302 = vector.broadcast %299 : f32 to vector<2x256xf32>
    %303 = arith.mulf %302, %265 : vector<2x256xf32>
    %304 = arith.addf %301, %303 : vector<2x256xf32>
    %305 = arith.addf %238, %304 : vector<2x256xf32>
    %c33 = arith.constant 33 : index
    %306 = memref.load %arg2[%c33] : memref<98xf32, #tpu.memory_space<smem>>
    %c82 = arith.constant 82 : index
    %307 = memref.load %arg2[%c82] : memref<98xf32, #tpu.memory_space<smem>>
    %308 = vector.broadcast %306 : f32 to vector<2x256xf32>
    %309 = arith.mulf %308, %260 : vector<2x256xf32>
    %310 = vector.broadcast %307 : f32 to vector<2x256xf32>
    %311 = arith.mulf %310, %265 : vector<2x256xf32>
    %312 = arith.addf %309, %311 : vector<2x256xf32>
    %313 = arith.addf %246, %312 : vector<2x256xf32>
    %c34 = arith.constant 34 : index
    %314 = memref.load %arg2[%c34] : memref<98xf32, #tpu.memory_space<smem>>
    %c83 = arith.constant 83 : index
    %315 = memref.load %arg2[%c83] : memref<98xf32, #tpu.memory_space<smem>>
    %316 = vector.broadcast %314 : f32 to vector<2x256xf32>
    %317 = arith.mulf %316, %260 : vector<2x256xf32>
    %318 = vector.broadcast %315 : f32 to vector<2x256xf32>
    %319 = arith.mulf %318, %265 : vector<2x256xf32>
    %320 = arith.addf %317, %319 : vector<2x256xf32>
    %321 = arith.addf %254, %320 : vector<2x256xf32>
    %c5_13 = arith.constant 5 : index
    %c0_14 = arith.constant 0 : index
    %322 = vector.load %arg3[%c5_13, %c0_14] : memref<7x256xf32, #tpu.memory_space<vmem>>, vector<1x256xf32>
    %323 = vector.extract_strided_slice %4 {offsets = [0, 32], sizes = [2, 224], strides = [1, 1]} : vector<2x256xf32> to vector<2x224xf32>
    %324 = vector.extract_strided_slice %4 {offsets = [0, 0], sizes = [2, 32], strides = [1, 1]} : vector<2x256xf32> to vector<2x32xf32>
    %325 = tpu.concatenate %323, %324 in 1 : vector<2x224xf32>, vector<2x32xf32> -> vector<2x256xf32>
    %326 = vector.broadcast %322 : vector<1x256xf32> to vector<2x256xf32>
    %327 = arith.mulf %325, %326 : vector<2x256xf32>
    %328 = vector.extract_strided_slice %2 {offsets = [0, 32], sizes = [2, 224], strides = [1, 1]} : vector<2x256xf32> to vector<2x224xf32>
    %329 = vector.extract_strided_slice %2 {offsets = [0, 0], sizes = [2, 32], strides = [1, 1]} : vector<2x256xf32> to vector<2x32xf32>
    %330 = tpu.concatenate %328, %329 in 1 : vector<2x224xf32>, vector<2x32xf32> -> vector<2x256xf32>
    %331 = vector.broadcast %322 : vector<1x256xf32> to vector<2x256xf32>
    %332 = arith.mulf %330, %331 : vector<2x256xf32>
    %c35 = arith.constant 35 : index
    %333 = memref.load %arg2[%c35] : memref<98xf32, #tpu.memory_space<smem>>
    %c84 = arith.constant 84 : index
    %334 = memref.load %arg2[%c84] : memref<98xf32, #tpu.memory_space<smem>>
    %335 = vector.broadcast %333 : f32 to vector<2x256xf32>
    %336 = arith.mulf %335, %327 : vector<2x256xf32>
    %337 = vector.broadcast %334 : f32 to vector<2x256xf32>
    %338 = arith.mulf %337, %332 : vector<2x256xf32>
    %339 = arith.addf %336, %338 : vector<2x256xf32>
    %340 = arith.addf %273, %339 : vector<2x256xf32>
    %c36 = arith.constant 36 : index
    %341 = memref.load %arg2[%c36] : memref<98xf32, #tpu.memory_space<smem>>
    %c85 = arith.constant 85 : index
    %342 = memref.load %arg2[%c85] : memref<98xf32, #tpu.memory_space<smem>>
    %343 = vector.broadcast %341 : f32 to vector<2x256xf32>
    %344 = arith.mulf %343, %327 : vector<2x256xf32>
    %345 = vector.broadcast %342 : f32 to vector<2x256xf32>
    %346 = arith.mulf %345, %332 : vector<2x256xf32>
    %347 = arith.addf %344, %346 : vector<2x256xf32>
    %348 = arith.addf %281, %347 : vector<2x256xf32>
    %c37 = arith.constant 37 : index
    %349 = memref.load %arg2[%c37] : memref<98xf32, #tpu.memory_space<smem>>
    %c86 = arith.constant 86 : index
    %350 = memref.load %arg2[%c86] : memref<98xf32, #tpu.memory_space<smem>>
    %351 = vector.broadcast %349 : f32 to vector<2x256xf32>
    %352 = arith.mulf %351, %327 : vector<2x256xf32>
    %353 = vector.broadcast %350 : f32 to vector<2x256xf32>
    %354 = arith.mulf %353, %332 : vector<2x256xf32>
    %355 = arith.addf %352, %354 : vector<2x256xf32>
    %356 = arith.addf %289, %355 : vector<2x256xf32>
    %c38 = arith.constant 38 : index
    %357 = memref.load %arg2[%c38] : memref<98xf32, #tpu.memory_space<smem>>
    %c87 = arith.constant 87 : index
    %358 = memref.load %arg2[%c87] : memref<98xf32, #tpu.memory_space<smem>>
    %359 = vector.broadcast %357 : f32 to vector<2x256xf32>
    %360 = arith.mulf %359, %327 : vector<2x256xf32>
    %361 = vector.broadcast %358 : f32 to vector<2x256xf32>
    %362 = arith.mulf %361, %332 : vector<2x256xf32>
    %363 = arith.addf %360, %362 : vector<2x256xf32>
    %364 = arith.addf %297, %363 : vector<2x256xf32>
    %c39 = arith.constant 39 : index
    %365 = memref.load %arg2[%c39] : memref<98xf32, #tpu.memory_space<smem>>
    %c88 = arith.constant 88 : index
    %366 = memref.load %arg2[%c88] : memref<98xf32, #tpu.memory_space<smem>>
    %367 = vector.broadcast %365 : f32 to vector<2x256xf32>
    %368 = arith.mulf %367, %327 : vector<2x256xf32>
    %369 = vector.broadcast %366 : f32 to vector<2x256xf32>
    %370 = arith.mulf %369, %332 : vector<2x256xf32>
    %371 = arith.addf %368, %370 : vector<2x256xf32>
    %372 = arith.addf %305, %371 : vector<2x256xf32>
    %c40 = arith.constant 40 : index
    %373 = memref.load %arg2[%c40] : memref<98xf32, #tpu.memory_space<smem>>
    %c89 = arith.constant 89 : index
    %374 = memref.load %arg2[%c89] : memref<98xf32, #tpu.memory_space<smem>>
    %375 = vector.broadcast %373 : f32 to vector<2x256xf32>
    %376 = arith.mulf %375, %327 : vector<2x256xf32>
    %377 = vector.broadcast %374 : f32 to vector<2x256xf32>
    %378 = arith.mulf %377, %332 : vector<2x256xf32>
    %379 = arith.addf %376, %378 : vector<2x256xf32>
    %380 = arith.addf %313, %379 : vector<2x256xf32>
    %c41 = arith.constant 41 : index
    %381 = memref.load %arg2[%c41] : memref<98xf32, #tpu.memory_space<smem>>
    %c90 = arith.constant 90 : index
    %382 = memref.load %arg2[%c90] : memref<98xf32, #tpu.memory_space<smem>>
    %383 = vector.broadcast %381 : f32 to vector<2x256xf32>
    %384 = arith.mulf %383, %327 : vector<2x256xf32>
    %385 = vector.broadcast %382 : f32 to vector<2x256xf32>
    %386 = arith.mulf %385, %332 : vector<2x256xf32>
    %387 = arith.addf %384, %386 : vector<2x256xf32>
    %388 = arith.addf %321, %387 : vector<2x256xf32>
    %c6_15 = arith.constant 6 : index
    %c0_16 = arith.constant 0 : index
    %389 = vector.load %arg3[%c6_15, %c0_16] : memref<7x256xf32, #tpu.memory_space<vmem>>, vector<1x256xf32>
    %390 = vector.extract_strided_slice %4 {offsets = [0, 48], sizes = [2, 208], strides = [1, 1]} : vector<2x256xf32> to vector<2x208xf32>
    %391 = vector.extract_strided_slice %4 {offsets = [0, 0], sizes = [2, 48], strides = [1, 1]} : vector<2x256xf32> to vector<2x48xf32>
    %392 = tpu.concatenate %390, %391 in 1 : vector<2x208xf32>, vector<2x48xf32> -> vector<2x256xf32>
    %393 = vector.broadcast %389 : vector<1x256xf32> to vector<2x256xf32>
    %394 = arith.mulf %392, %393 : vector<2x256xf32>
    %395 = vector.extract_strided_slice %2 {offsets = [0, 48], sizes = [2, 208], strides = [1, 1]} : vector<2x256xf32> to vector<2x208xf32>
    %396 = vector.extract_strided_slice %2 {offsets = [0, 0], sizes = [2, 48], strides = [1, 1]} : vector<2x256xf32> to vector<2x48xf32>
    %397 = tpu.concatenate %395, %396 in 1 : vector<2x208xf32>, vector<2x48xf32> -> vector<2x256xf32>
    %398 = vector.broadcast %389 : vector<1x256xf32> to vector<2x256xf32>
    %399 = arith.mulf %397, %398 : vector<2x256xf32>
    %c42 = arith.constant 42 : index
    %400 = memref.load %arg2[%c42] : memref<98xf32, #tpu.memory_space<smem>>
    %c91 = arith.constant 91 : index
    %401 = memref.load %arg2[%c91] : memref<98xf32, #tpu.memory_space<smem>>
    %402 = vector.broadcast %400 : f32 to vector<2x256xf32>
    %403 = arith.mulf %402, %394 : vector<2x256xf32>
    %404 = vector.broadcast %401 : f32 to vector<2x256xf32>
    %405 = arith.mulf %404, %399 : vector<2x256xf32>
    %406 = arith.addf %403, %405 : vector<2x256xf32>
    %407 = arith.addf %340, %406 : vector<2x256xf32>
    %c43 = arith.constant 43 : index
    %408 = memref.load %arg2[%c43] : memref<98xf32, #tpu.memory_space<smem>>
    %c92 = arith.constant 92 : index
    %409 = memref.load %arg2[%c92] : memref<98xf32, #tpu.memory_space<smem>>
    %410 = vector.broadcast %408 : f32 to vector<2x256xf32>
    %411 = arith.mulf %410, %394 : vector<2x256xf32>
    %412 = vector.broadcast %409 : f32 to vector<2x256xf32>
    %413 = arith.mulf %412, %399 : vector<2x256xf32>
    %414 = arith.addf %411, %413 : vector<2x256xf32>
    %415 = arith.addf %348, %414 : vector<2x256xf32>
    %c44 = arith.constant 44 : index
    %416 = memref.load %arg2[%c44] : memref<98xf32, #tpu.memory_space<smem>>
    %c93 = arith.constant 93 : index
    %417 = memref.load %arg2[%c93] : memref<98xf32, #tpu.memory_space<smem>>
    %418 = vector.broadcast %416 : f32 to vector<2x256xf32>
    %419 = arith.mulf %418, %394 : vector<2x256xf32>
    %420 = vector.broadcast %417 : f32 to vector<2x256xf32>
    %421 = arith.mulf %420, %399 : vector<2x256xf32>
    %422 = arith.addf %419, %421 : vector<2x256xf32>
    %423 = arith.addf %356, %422 : vector<2x256xf32>
    %c45 = arith.constant 45 : index
    %424 = memref.load %arg2[%c45] : memref<98xf32, #tpu.memory_space<smem>>
    %c94 = arith.constant 94 : index
    %425 = memref.load %arg2[%c94] : memref<98xf32, #tpu.memory_space<smem>>
    %426 = vector.broadcast %424 : f32 to vector<2x256xf32>
    %427 = arith.mulf %426, %394 : vector<2x256xf32>
    %428 = vector.broadcast %425 : f32 to vector<2x256xf32>
    %429 = arith.mulf %428, %399 : vector<2x256xf32>
    %430 = arith.addf %427, %429 : vector<2x256xf32>
    %431 = arith.addf %364, %430 : vector<2x256xf32>
    %c46 = arith.constant 46 : index
    %432 = memref.load %arg2[%c46] : memref<98xf32, #tpu.memory_space<smem>>
    %c95 = arith.constant 95 : index
    %433 = memref.load %arg2[%c95] : memref<98xf32, #tpu.memory_space<smem>>
    %434 = vector.broadcast %432 : f32 to vector<2x256xf32>
    %435 = arith.mulf %434, %394 : vector<2x256xf32>
    %436 = vector.broadcast %433 : f32 to vector<2x256xf32>
    %437 = arith.mulf %436, %399 : vector<2x256xf32>
    %438 = arith.addf %435, %437 : vector<2x256xf32>
    %439 = arith.addf %372, %438 : vector<2x256xf32>
    %c47 = arith.constant 47 : index
    %440 = memref.load %arg2[%c47] : memref<98xf32, #tpu.memory_space<smem>>
    %c96 = arith.constant 96 : index
    %441 = memref.load %arg2[%c96] : memref<98xf32, #tpu.memory_space<smem>>
    %442 = vector.broadcast %440 : f32 to vector<2x256xf32>
    %443 = arith.mulf %442, %394 : vector<2x256xf32>
    %444 = vector.broadcast %441 : f32 to vector<2x256xf32>
    %445 = arith.mulf %444, %399 : vector<2x256xf32>
    %446 = arith.addf %443, %445 : vector<2x256xf32>
    %447 = arith.addf %380, %446 : vector<2x256xf32>
    %c48 = arith.constant 48 : index
    %448 = memref.load %arg2[%c48] : memref<98xf32, #tpu.memory_space<smem>>
    %c97 = arith.constant 97 : index
    %449 = memref.load %arg2[%c97] : memref<98xf32, #tpu.memory_space<smem>>
    %450 = vector.broadcast %448 : f32 to vector<2x256xf32>
    %451 = arith.mulf %450, %394 : vector<2x256xf32>
    %452 = vector.broadcast %449 : f32 to vector<2x256xf32>
    %453 = arith.mulf %452, %399 : vector<2x256xf32>
    %454 = arith.addf %451, %453 : vector<2x256xf32>
    %455 = arith.addf %388, %454 : vector<2x256xf32>
    %c0_17 = arith.constant 0 : index
    %c0_18 = arith.constant 0 : index
    %456 = vector.load %arg4[%c0_17, %c0_18] : memref<7x256xf32, #tpu.memory_space<vmem>>, vector<1x256xf32>
    %457 = vector.extract_strided_slice %407 {offsets = [0, 253], sizes = [2, 3], strides = [1, 1]} : vector<2x256xf32> to vector<2x3xf32>
    %458 = vector.extract_strided_slice %407 {offsets = [0, 0], sizes = [2, 253], strides = [1, 1]} : vector<2x256xf32> to vector<2x253xf32>
    %459 = tpu.concatenate %457, %458 in 1 : vector<2x3xf32>, vector<2x253xf32> -> vector<2x256xf32>
    %460 = vector.broadcast %456 : vector<1x256xf32> to vector<2x256xf32>
    %461 = arith.mulf %459, %460 : vector<2x256xf32>
    %c1_19 = arith.constant 1 : index
    %c0_20 = arith.constant 0 : index
    %462 = vector.load %arg4[%c1_19, %c0_20] : memref<7x256xf32, #tpu.memory_space<vmem>>, vector<1x256xf32>
    %463 = vector.extract_strided_slice %415 {offsets = [0, 254], sizes = [2, 2], strides = [1, 1]} : vector<2x256xf32> to vector<2x2xf32>
    %464 = vector.extract_strided_slice %415 {offsets = [0, 0], sizes = [2, 254], strides = [1, 1]} : vector<2x256xf32> to vector<2x254xf32>
    %465 = tpu.concatenate %463, %464 in 1 : vector<2x2xf32>, vector<2x254xf32> -> vector<2x256xf32>
    %466 = vector.broadcast %462 : vector<1x256xf32> to vector<2x256xf32>
    %467 = arith.mulf %465, %466 : vector<2x256xf32>
    %468 = arith.addf %461, %467 : vector<2x256xf32>
    %c2_21 = arith.constant 2 : index
    %c0_22 = arith.constant 0 : index
    %469 = vector.load %arg4[%c2_21, %c0_22] : memref<7x256xf32, #tpu.memory_space<vmem>>, vector<1x256xf32>
    %470 = vector.extract_strided_slice %423 {offsets = [0, 255], sizes = [2, 1], strides = [1, 1]} : vector<2x256xf32> to vector<2x1xf32>
    %471 = vector.extract_strided_slice %423 {offsets = [0, 0], sizes = [2, 255], strides = [1, 1]} : vector<2x256xf32> to vector<2x255xf32>
    %472 = tpu.concatenate %470, %471 in 1 : vector<2x1xf32>, vector<2x255xf32> -> vector<2x256xf32>
    %473 = vector.broadcast %469 : vector<1x256xf32> to vector<2x256xf32>
    %474 = arith.mulf %472, %473 : vector<2x256xf32>
    %475 = arith.addf %468, %474 : vector<2x256xf32>
    %476 = arith.addf %475, %431 : vector<2x256xf32>
    %c4_23 = arith.constant 4 : index
    %c0_24 = arith.constant 0 : index
    %477 = vector.load %arg4[%c4_23, %c0_24] : memref<7x256xf32, #tpu.memory_space<vmem>>, vector<1x256xf32>
    %478 = vector.extract_strided_slice %439 {offsets = [0, 1], sizes = [2, 255], strides = [1, 1]} : vector<2x256xf32> to vector<2x255xf32>
    %479 = vector.extract_strided_slice %439 {offsets = [0, 0], sizes = [2, 1], strides = [1, 1]} : vector<2x256xf32> to vector<2x1xf32>
    %480 = tpu.concatenate %478, %479 in 1 : vector<2x255xf32>, vector<2x1xf32> -> vector<2x256xf32>
    %481 = vector.broadcast %477 : vector<1x256xf32> to vector<2x256xf32>
    %482 = arith.mulf %480, %481 : vector<2x256xf32>
    %483 = arith.addf %476, %482 : vector<2x256xf32>
    %c5_25 = arith.constant 5 : index
    %c0_26 = arith.constant 0 : index
    %484 = vector.load %arg4[%c5_25, %c0_26] : memref<7x256xf32, #tpu.memory_space<vmem>>, vector<1x256xf32>
    %485 = vector.extract_strided_slice %447 {offsets = [0, 2], sizes = [2, 254], strides = [1, 1]} : vector<2x256xf32> to vector<2x254xf32>
    %486 = vector.extract_strided_slice %447 {offsets = [0, 0], sizes = [2, 2], strides = [1, 1]} : vector<2x256xf32> to vector<2x2xf32>
    %487 = tpu.concatenate %485, %486 in 1 : vector<2x254xf32>, vector<2x2xf32> -> vector<2x256xf32>
    %488 = vector.broadcast %484 : vector<1x256xf32> to vector<2x256xf32>
    %489 = arith.mulf %487, %488 : vector<2x256xf32>
    %490 = arith.addf %483, %489 : vector<2x256xf32>
    %c6_27 = arith.constant 6 : index
    %c0_28 = arith.constant 0 : index
    %491 = vector.load %arg4[%c6_27, %c0_28] : memref<7x256xf32, #tpu.memory_space<vmem>>, vector<1x256xf32>
    %492 = vector.extract_strided_slice %455 {offsets = [0, 3], sizes = [2, 253], strides = [1, 1]} : vector<2x256xf32> to vector<2x253xf32>
    %493 = vector.extract_strided_slice %455 {offsets = [0, 0], sizes = [2, 3], strides = [1, 1]} : vector<2x256xf32> to vector<2x3xf32>
    %494 = tpu.concatenate %492, %493 in 1 : vector<2x253xf32>, vector<2x3xf32> -> vector<2x256xf32>
    %495 = vector.broadcast %491 : vector<1x256xf32> to vector<2x256xf32>
    %496 = arith.mulf %494, %495 : vector<2x256xf32>
    %497 = arith.addf %490, %496 : vector<2x256xf32>
    %498 = arith.negf %497 : vector<2x256xf32>
    %499 = math.exp %498 : vector<2x256xf32>
    %cst_29 = arith.constant 1.000000e+00 : f32
    %500 = vector.broadcast %cst_29 : f32 to vector<2x256xf32>
    %501 = arith.addf %500, %499 : vector<2x256xf32>
    %502 = arith.divf %500, %501 : vector<2x256xf32>
    %503 = vector.shape_cast %502 : vector<2x256xf32> to vector<2x1x256xf32>
    %c0_30 = arith.constant 0 : index
    %c0_31 = arith.constant 0 : index
    %c0_32 = arith.constant 0 : index
    %504 = vector.load %arg6[%c0_30, %c0_31, %c0_32] : memref<2x1x256xf32, #tpu.memory_space<vmem>>, vector<2x1x256xf32>
    tpu.vector_store %arg6[%c0_30, %c0_31, %c0_32], %503 {strides = array<i32>} : memref<2x1x256xf32, #tpu.memory_space<vmem>>, vector<2x1x256xf32>,
    return
  }
  func.func @transform_0(%arg0: i32, %arg1: i32) -> i32 {
    %c0_i32 = arith.constant 0 : i32
    %c0_i32_0 = arith.constant 0 : i32
    return %c0_i32 : i32
  }
  func.func @transform_1(%arg0: i32, %arg1: i32) -> (i32, i32) {
    %c0_i32 = arith.constant 0 : i32
    %c0_i32_0 = arith.constant 0 : i32
    %c0_i32_1 = arith.constant 0 : i32
    return %c0_i32, %c0_i32_0 : i32, i32
  }
  func.func @transform_2(%arg0: i32, %arg1: i32) -> (i32, i32) {
    %c0_i32 = arith.constant 0 : i32
    %c0_i32_0 = arith.constant 0 : i32
    %c0_i32_1 = arith.constant 0 : i32
    return %c0_i32, %c0_i32_0 : i32, i32
  }
  func.func @transform_3(%arg0: i32, %arg1: i32) -> (i32, i32, i32) {
    %c0_i32 = arith.constant 0 : i32
    %c0_i32_0 = arith.constant 0 : i32
    return %arg0, %arg1, %c0_i32 : i32, i32, i32
  }
  func.func @transform_4(%arg0: i32, %arg1: i32) -> (i32, i32, i32) {
    %c0_i32 = arith.constant 0 : i32
    %c0_i32_0 = arith.constant 0 : i32
    %c0_i32_1 = arith.constant 0 : i32
    return %arg0, %c0_i32, %c0_i32_0 : i32, i32, i32
  }
}

</mosaic_0001>

<llo_original>
// kernel: tpu_custom_call.1
$region0: #{tpu_custom_call.1}
  #allocation0 [shape = 'u32[]', space=smem, size = 0x4, offset = 0x4, fixed_abs, tag = 'smem constant byte address 0x4 - core index']
  #allocation1 [shape = 'u32[144,128]{1,0:T(1,128)}', space=vmem, size = 0x12000, scoped, tag = 'internal scratch']
  %s0 = inlined_call_operand.hbm [shape: f32[98], index: 0, kind: input, shape index: {}]
  %s1 = inlined_call_operand.hbm [shape: f32[7,256], index: 1, kind: input, shape index: {}]
  %s2 = inlined_call_operand.hbm [shape: f32[7,256], index: 2, kind: input, shape index: {}]
  %s3 = inlined_call_operand.hbm [shape: f32[2,4,256], index: 3, kind: input, shape index: {}]
  %s4 = inlined_call_operand.hbm [shape: f32[2,1,256], index: 4, kind: output, shape index: {}]
  %s5 = sld [smem:[#allocation0]]
  $region42: #{tpu_custom_call.1} parent=0
    _
  %s7 = ssub.s32 1, %s5
  %s8 = scalar_select 0, %s7, %s5
  $region1: #{tpu_custom_call.1} parent=0
    #allocation2 [shape = 'u8[512]{0}', space=smem, size = 0x200, scoped, tag = 'input window, operand 0, single buffered']
    #allocation3 [shape = 's32[1]{0}', space=sflag, size = 0x4, scoped, tag = 'scoped memory for tpu_custom_call.1']
    #allocation4 [shape = 's32[1]{0}', space=sflag, size = 0x4, scoped, tag = 'scoped memory for tpu_custom_call.1']
    #allocation5 [shape = 's32[1]{0}', space=sflag, size = 0x4, scoped, tag = 'scoped memory for tpu_custom_call.1']
    #allocation6 [shape = 'u8[8192]{0}', space=vmem, size = 0x2000, scoped, tag = 'input window, operand 1, single buffered']
    #allocation7 [shape = 'u8[8192]{0}', space=vmem, size = 0x2000, scoped, tag = 'input window, operand 2, single buffered']
    #allocation8 [shape = 's32[1]{0}', space=sflag, size = 0x4, scoped, tag = 'scoped memory for tpu_custom_call.1']
    #allocation9 [shape = 'u8[8192]{0}', space=vmem, size = 0x2000, scoped, tag = 'input window, operand 3, single buffered']
    #allocation10 [shape = 'u8[2048]{0}', space=vmem, size = 0x800, scoped, tag = 'output window, operand 0, single buffered']
    %9 = vsyncpa [#allocation5], 0
    %10 = vsyncpa [#allocation3], 0
    %11 = vsyncpa [#allocation8], 0
    %12 = vsyncpa [#allocation4], 0
    // Predicated region
    $region2: #{tpu_custom_call.1} parent=1 // pred_check
      _
    $region3: #{tpu_custom_call.1} parent=1 // pred_check_branch
      %14 = sbr.rel (0) target = $region5
    $region4: #{tpu_custom_call.1} parent=1 // pred_region
      %s16 = ssub.s32 16, 16
      %17 = vsyncadd [#allocation5], %s16
      %20 = dma.hbm_to_smem %s0, 16, [#allocation2], [#allocation5]
    $region5: #{tpu_custom_call.1} parent=1 // pred_fallthru
      _
    // Predicated region
    $region6: #{tpu_custom_call.1} parent=1 // pred_check
      _
    $region7: #{tpu_custom_call.1} parent=1 // pred_check_branch
      %22 = sbr.rel (0) target = $region9
    $region8: #{tpu_custom_call.1} parent=1 // pred_region
      %s24 = ssub.s32 256, 256
      %25 = vsyncadd [#allocation3], %s24
      %s27 = sshll.u32 [#allocation6], 4
      %s28 = int_to_ptr.vmem [resolvable:$true] %s27
      %30 = dma.hbm_to_vmem [thread:$0]  %s1, 256, %s28, [#allocation3]
    $region9: #{tpu_custom_call.1} parent=1 // pred_fallthru
      _
    // Predicated region
    $region10: #{tpu_custom_call.1} parent=1 // pred_check
      _
    $region11: #{tpu_custom_call.1} parent=1 // pred_check_branch
      %32 = sbr.rel (0) target = $region13
    $region12: #{tpu_custom_call.1} parent=1 // pred_region
      %s34 = ssub.s32 256, 256
      %35 = vsyncadd [#allocation8], %s34
      %s37 = sshll.u32 [#allocation7], 4
      %s38 = int_to_ptr.vmem [resolvable:$true] %s37
      %40 = dma.hbm_to_vmem [thread:$0]  %s2, 256, %s38, [#allocation8]
    $region13: #{tpu_custom_call.1} parent=1 // pred_fallthru
      _
    // Predicated region
    $region14: #{tpu_custom_call.1} parent=1 // pred_check
      _
    $region15: #{tpu_custom_call.1} parent=1 // pred_check_branch
      %42 = sbr.rel (0) target = $region17
    $region16: #{tpu_custom_call.1} parent=1 // pred_region
      %s44 = ssub.s32 256, 256
      %45 = vsyncadd [#allocation8], %s44
      %s46 = sshll.u32 [#allocation9], 4
      %s47 = int_to_ptr.vmem [resolvable:$true] %s46
      %52 = dma.hbm_to_vmem [thread:$0]  %s3, 256, %s47, [#allocation8], 128, 128, 8
    $region17: #{tpu_custom_call.1} parent=1 // pred_fallthru
      _
    // Predicated region
    $region18: #{tpu_custom_call.1} parent=1 // pred_check
      _
    $region19: #{tpu_custom_call.1} parent=1 // pred_check_branch
      %54 = sbr.rel (0) target = $region21
    $region20: #{tpu_custom_call.1} parent=1 // pred_region
      %55 = dma.done [#allocation5], 16
    $region21: #{tpu_custom_call.1} parent=1 // pred_fallthru
      _
    // Predicated region
    $region22: #{tpu_custom_call.1} parent=1 // pred_check
      _
    $region23: #{tpu_custom_call.1} parent=1 // pred_check_branch
      %57 = sbr.rel (0) target = $region25
    $region24: #{tpu_custom_call.1} parent=1 // pred_region
      %58 = dma.done [#allocation3], 256
    $region25: #{tpu_custom_call.1} parent=1 // pred_fallthru
      _
    // Predicated region
    $region26: #{tpu_custom_call.1} parent=1 // pred_check
      _
    $region27: #{tpu_custom_call.1} parent=1 // pred_check_branch
      %60 = sbr.rel (0) target = $region29
    $region28: #{tpu_custom_call.1} parent=1 // pred_region
      %61 = dma.done [#allocation8], 256
    $region29: #{tpu_custom_call.1} parent=1 // pred_fallthru
      _
    // Predicated region
    $region30: #{tpu_custom_call.1} parent=1 // pred_check
      _
    $region31: #{tpu_custom_call.1} parent=1 // pred_check_branch
      %63 = sbr.rel (0) target = $region33
    $region32: #{tpu_custom_call.1} parent=1 // pred_region
      %64 = dma.done [#allocation8], 256
    $region33: #{tpu_custom_call.1} parent=1 // pred_fallthru
      _
    %65 = sfence
    %v66 = vld [vmem:[#allocation9] sm:$0xff]
    %v67 = vld [vmem:[#allocation9 + $0x8] sm:$0xff]
    %v70 = vcombine.high %v66, %v66
    %v71 = vcombine.high %v67, %v67
    %vm74 = vcmask 1043456
    %v75 = vsel %vm74, %v66, 0.0
    %v76 = vrot.slane %v75, 4
    %v77 = vadd.f32 %v75, %v76
    %v78 = vrot.slane %v77, 2
    %v79 = vadd.f32 %v77, %v78
    %v80 = vrot.slane %v79, 1
    %v81 = vadd.f32 %v79, %v80
    %v82 = vsel %vm74, %v70, 0.0
    %v83 = vrot.slane %v82, 4
    %v84 = vadd.f32 %v82, %v83
    %v85 = vrot.slane %v84, 2
    %v86 = vadd.f32 %v84, %v85
    %v87 = vrot.slane %v86, 1
    %v88 = vadd.f32 %v86, %v87
    %v89 = vsel %vm74, %v67, 0.0
    %v90 = vrot.slane %v89, 4
    %v91 = vadd.f32 %v89, %v90
    %v92 = vrot.slane %v91, 2
    %v93 = vadd.f32 %v91, %v92
    %v94 = vrot.slane %v93, 1
    %v95 = vadd.f32 %v93, %v94
    %v96 = vsel %vm74, %v71, 0.0
    %v97 = vrot.slane %v96, 4
    %v98 = vadd.f32 %v96, %v97
    %v99 = vrot.slane %v98, 2
    %v100 = vadd.f32 %v98, %v99
    %v101 = vrot.slane %v100, 1
    %v102 = vadd.f32 %v100, %v101
    %v103 = vsel %vm74, %v66, -inf
    %v104 = vrot.slane %v103, 4
    %v105 = vmax.f32 %v103, %v104
    %v106 = vrot.slane %v105, 2
    %v107 = vmax.f32 %v105, %v106
    %v108 = vrot.slane %v107, 1
    %v109 = vmax.f32 %v107, %v108
    %v110 = vsel %vm74, %v70, -inf
    %v111 = vrot.slane %v110, 4
    %v112 = vmax.f32 %v110, %v111
    %v113 = vrot.slane %v112, 2
    %v114 = vmax.f32 %v112, %v113
    %v115 = vrot.slane %v114, 1
    %v116 = vmax.f32 %v114, %v115
    %v117 = vsel %vm74, %v67, -inf
    %v118 = vrot.slane %v117, 4
    %v119 = vmax.f32 %v117, %v118
    %v120 = vrot.slane %v119, 2
    %v121 = vmax.f32 %v119, %v120
    %v122 = vrot.slane %v121, 1
    %v123 = vmax.f32 %v121, %v122
    %v124 = vsel %vm74, %v71, -inf
    %v125 = vrot.slane %v124, 4
    %v126 = vmax.f32 %v124, %v125
    %v127 = vrot.slane %v126, 2
    %v128 = vmax.f32 %v126, %v127
    %v129 = vrot.slane %v128, 1
    %v130 = vmax.f32 %v128, %v129
    %v131 = vmul.f32 %v81, 0.25
    %v132 = vmul.f32 %v88, 0.25
    %v133 = vmul.f32 %v95, 0.25
    %v134 = vmul.f32 %v102, 0.25
    %v135 = vld [vmem:[#allocation6] ss:$8 sm:$0x3]
    %vm138 = vcmask 1041409
    %v139 = vsel %vm138, %v134, %v132
    %140 = vrot.lane.b32.xlu0 %v139, 48
    %v141 = vpop.permute.xlu0 %140
    %v145 = vsel %vm138, %v133, %v131
    %146 = vrot.lane.b32.xlu0 %v145, 48
    %v147 = vpop.permute.xlu0 %146
    %vm148 = vcmask 392192
    %v149 = vsel %vm148, %v147, %v141
    %v152 = vsel %vm148, %v141, %v147
    %v154 = vlaneseq
    %v155 = vshrl.u32 %v154, 7
    %v156 = vsub.s32 0, %v155
    %v157 = vrot.slane %v135, %v156
    %v158 = vlaneseq
    %v159 = vshrl.u32 %v158, 7
    %v160 = vsub.s32 1, %v159
    %v161 = vrot.slane %v135, %v160
    %v164 = vmul.f32 %v152, %v157
    %v165 = vmul.f32 %v149, %v161
    %v168 = vsel %vm138, %v130, %v116
    %169 = vrot.lane.b32.xlu0 %v168, 48
    %v170 = vpop.permute.xlu0 %169
    %v174 = vsel %vm138, %v123, %v109
    %175 = vrot.lane.b32.xlu0 %v174, 48
    %v176 = vpop.permute.xlu0 %175
    %v177 = vsel %vm148, %v176, %v170
    %v180 = vsel %vm148, %v170, %v176
    %v181 = vmul.f32 %v180, %v157
    %v182 = vmul.f32 %v177, %v161
    %s183 = sld [smem:[#allocation2]]
    %s184 = sld [smem:[#allocation2 + $0x31]]
    %v185 = vstv %s183
    %v186 = vmul.f32 %v185, %v164
    %v187 = vmul.f32 %v185, %v165
    %v188 = vstv %s184
    %v189 = vmul.f32 %v188, %v181
    %v190 = vmul.f32 %v188, %v182
    %v191 = vadd.f32 %v186, %v189
    %v192 = vadd.f32 %v187, %v190
    %s193 = sld [smem:[#allocation2 + $0x1]]
    %s194 = sld [smem:[#allocation2 + $0x32]]
    %v195 = vstv %s193
    %v196 = vmul.f32 %v195, %v164
    %v197 = vmul.f32 %v195, %v165
    %v198 = vstv %s194
    %v199 = vmul.f32 %v198, %v181
    %v200 = vmul.f32 %v198, %v182
    %v201 = vadd.f32 %v196, %v199
    %v202 = vadd.f32 %v197, %v200
    %s203 = sld [smem:[#allocation2 + $0x2]]
    %s204 = sld [smem:[#allocation2 + $0x33]]
    %v205 = vstv %s203
    %v206 = vmul.f32 %v205, %v164
    %v207 = vmul.f32 %v205, %v165
    %v208 = vstv %s204
    %v209 = vmul.f32 %v208, %v181
    %v210 = vmul.f32 %v208, %v182
    %v211 = vadd.f32 %v206, %v209
    %v212 = vadd.f32 %v207, %v210
    %s213 = sld [smem:[#allocation2 + $0x3]]
    %s214 = sld [smem:[#allocation2 + $0x34]]
    %v215 = vstv %s213
    %v216 = vmul.f32 %v215, %v164
    %v217 = vmul.f32 %v215, %v165
    %v218 = vstv %s214
    %v219 = vmul.f32 %v218, %v181
    %v220 = vmul.f32 %v218, %v182
    %v221 = vadd.f32 %v216, %v219
    %v222 = vadd.f32 %v217, %v220
    %s223 = sld [smem:[#allocation2 + $0x4]]
    %s224 = sld [smem:[#allocation2 + $0x35]]
    %v225 = vstv %s223
    %v226 = vmul.f32 %v225, %v164
    %v227 = vmul.f32 %v225, %v165
    %v228 = vstv %s224
    %v229 = vmul.f32 %v228, %v181
    %v230 = vmul.f32 %v228, %v182
    %v231 = vadd.f32 %v226, %v229
    %v232 = vadd.f32 %v227, %v230
    %s233 = sld [smem:[#allocation2 + $0x5]]
    %s234 = sld [smem:[#allocation2 + $0x36]]
    %v235 = vstv %s233
    %v236 = vmul.f32 %v235, %v164
    %v237 = vmul.f32 %v235, %v165
    %v238 = vstv %s234
    %v239 = vmul.f32 %v238, %v181
    %v240 = vmul.f32 %v238, %v182
    %v241 = vadd.f32 %v236, %v239
    %v242 = vadd.f32 %v237, %v240
    %s243 = sld [smem:[#allocation2 + $0x6]]
    %s244 = sld [smem:[#allocation2 + $0x37]]
    %v245 = vstv %s243
    %v246 = vmul.f32 %v245, %v164
    %v247 = vmul.f32 %v245, %v165
    %v248 = vstv %s244
    %v249 = vmul.f32 %v248, %v181
    %v250 = vmul.f32 %v248, %v182
    %v251 = vadd.f32 %v246, %v249
    %v252 = vadd.f32 %v247, %v250
    %s253 = scalar_lea.vmem [#allocation6], 1
    %v254 = vld [vmem:[%s253] ss:$8 sm:$0x3]
    %255 = vrot.lane.b32.xlu0 %v139, 32
    %v256 = vpop.permute.xlu0 %255
    %258 = vrot.lane.b32.xlu0 %v145, 32
    %v259 = vpop.permute.xlu0 %258
    %vm260 = vcmask 261120
    %v261 = vsel %vm260, %v259, %v256
    %v264 = vsel %vm260, %v256, %v259
    %v266 = vlaneseq
    %v267 = vshrl.u32 %v266, 7
    %v268 = vsub.s32 0, %v267
    %v269 = vrot.slane %v254, %v268
    %v270 = vlaneseq
    %v271 = vshrl.u32 %v270, 7
    %v272 = vsub.s32 1, %v271
    %v273 = vrot.slane %v254, %v272
    %v276 = vmul.f32 %v264, %v269
    %v277 = vmul.f32 %v261, %v273
    %278 = vrot.lane.b32.xlu0 %v168, 32
    %v279 = vpop.permute.xlu0 %278
    %281 = vrot.lane.b32.xlu0 %v174, 32
    %v282 = vpop.permute.xlu0 %281
    %v283 = vsel %vm260, %v282, %v279
    %v286 = vsel %vm260, %v279, %v282
    %v287 = vmul.f32 %v286, %v269
    %v288 = vmul.f32 %v283, %v273
    %s289 = sld [smem:[#allocation2 + $0x7]]
    %s290 = sld [smem:[#allocation2 + $0x38]]
    %v291 = vstv %s289
    %v292 = vmul.f32 %v291, %v276
    %v293 = vmul.f32 %v291, %v277
    %v294 = vstv %s290
    %v295 = vmul.f32 %v294, %v287
    %v296 = vmul.f32 %v294, %v288
    %v297 = vadd.f32 %v292, %v295
    %v298 = vadd.f32 %v293, %v296
    %v299 = vadd.f32 %v191, %v297
    %v300 = vadd.f32 %v192, %v298
    %s301 = sld [smem:[#allocation2 + $0x8]]
    %s302 = sld [smem:[#allocation2 + $0x39]]
    %v303 = vstv %s301
    %v304 = vmul.f32 %v303, %v276
    %v305 = vmul.f32 %v303, %v277
    %v306 = vstv %s302
    %v307 = vmul.f32 %v306, %v287
    %v308 = vmul.f32 %v306, %v288
    %v309 = vadd.f32 %v304, %v307
    %v310 = vadd.f32 %v305, %v308
    %v311 = vadd.f32 %v201, %v309
    %v312 = vadd.f32 %v202, %v310
    %s313 = sld [smem:[#allocation2 + $0x9]]
    %s314 = sld [smem:[#allocation2 + $0x3a]]
    %v315 = vstv %s313
    %v316 = vmul.f32 %v315, %v276
    %v317 = vmul.f32 %v315, %v277
    %v318 = vstv %s314
    %v319 = vmul.f32 %v318, %v287
    %v320 = vmul.f32 %v318, %v288
    %v321 = vadd.f32 %v316, %v319
    %v322 = vadd.f32 %v317, %v320
    %v323 = vadd.f32 %v211, %v321
    %v324 = vadd.f32 %v212, %v322
    %s325 = sld [smem:[#allocation2 + $0xa]]
    %s326 = sld [smem:[#allocation2 + $0x3b]]
    %v327 = vstv %s325
    %v328 = vmul.f32 %v327, %v276
    %v329 = vmul.f32 %v327, %v277
    %v330 = vstv %s326
    %v331 = vmul.f32 %v330, %v287
    %v332 = vmul.f32 %v330, %v288
    %v333 = vadd.f32 %v328, %v331
    %v334 = vadd.f32 %v329, %v332
    %v335 = vadd.f32 %v221, %v333
    %v336 = vadd.f32 %v222, %v334
    %s337 = sld [smem:[#allocation2 + $0xb]]
    %s338 = sld [smem:[#allocation2 + $0x3c]]
    %v339 = vstv %s337
    %v340 = vmul.f32 %v339, %v276
    %v341 = vmul.f32 %v339, %v277
    %v342 = vstv %s338
    %v343 = vmul.f32 %v342, %v287
    %v344 = vmul.f32 %v342, %v288
    %v345 = vadd.f32 %v340, %v343
    %v346 = vadd.f32 %v341, %v344
    %v347 = vadd.f32 %v231, %v345
    %v348 = vadd.f32 %v232, %v346
    %s349 = sld [smem:[#allocation2 + $0xc]]
    %s350 = sld [smem:[#allocation2 + $0x3d]]
    %v351 = vstv %s349
    %v352 = vmul.f32 %v351, %v276
    %v353 = vmul.f32 %v351, %v277
    %v354 = vstv %s350
    %v355 = vmul.f32 %v354, %v287
    %v356 = vmul.f32 %v354, %v288
    %v357 = vadd.f32 %v352, %v355
    %v358 = vadd.f32 %v353, %v356
    %v359 = vadd.f32 %v241, %v357
    %v360 = vadd.f32 %v242, %v358
    %s361 = sld [smem:[#allocation2 + $0xd]]
    %s362 = sld [smem:[#allocation2 + $0x3e]]
    %v363 = vstv %s361
    %v364 = vmul.f32 %v363, %v276
    %v365 = vmul.f32 %v363, %v277
    %v366 = vstv %s362
    %v367 = vmul.f32 %v366, %v287
    %v368 = vmul.f32 %v366, %v288
    %v369 = vadd.f32 %v364, %v367
    %v370 = vadd.f32 %v365, %v368
    %v371 = vadd.f32 %v251, %v369
    %v372 = vadd.f32 %v252, %v370
    %s373 = scalar_lea.vmem [#allocation6], 2
    %v374 = vld [vmem:[%s373] ss:$8 sm:$0x3]
    %375 = vrot.lane.b32.xlu0 %v139, 16
    %v376 = vpop.permute.xlu0 %375
    %378 = vrot.lane.b32.xlu0 %v145, 16
    %v379 = vpop.permute.xlu0 %378
    %vm380 = vcmask 130048
    %v381 = vsel %vm380, %v379, %v376
    %v384 = vsel %vm380, %v376, %v379
    %v386 = vlaneseq
    %v387 = vshrl.u32 %v386, 7
    %v388 = vsub.s32 0, %v387
    %v389 = vrot.slane %v374, %v388
    %v390 = vlaneseq
    %v391 = vshrl.u32 %v390, 7
    %v392 = vsub.s32 1, %v391
    %v393 = vrot.slane %v374, %v392
    %v396 = vmul.f32 %v384, %v389
    %v397 = vmul.f32 %v381, %v393
    %398 = vrot.lane.b32.xlu0 %v168, 16
    %v399 = vpop.permute.xlu0 %398
    %401 = vrot.lane.b32.xlu0 %v174, 16
    %v402 = vpop.permute.xlu0 %401
    %v403 = vsel %vm380, %v402, %v399
    %v406 = vsel %vm380, %v399, %v402
    %v407 = vmul.f32 %v406, %v389
    %v408 = vmul.f32 %v403, %v393
    %s409 = sld [smem:[#allocation2 + $0xe]]
    %s410 = sld [smem:[#allocation2 + $0x3f]]
    %v411 = vstv %s409
    %v412 = vmul.f32 %v411, %v396
    %v413 = vmul.f32 %v411, %v397
    %v414 = vstv %s410
    %v415 = vmul.f32 %v414, %v407
    %v416 = vmul.f32 %v414, %v408
    %v417 = vadd.f32 %v412, %v415
    %v418 = vadd.f32 %v413, %v416
    %v419 = vadd.f32 %v299, %v417
    %v420 = vadd.f32 %v300, %v418
    %s421 = sld [smem:[#allocation2 + $0xf]]
    %s422 = sld [smem:[#allocation2 + $0x40]]
    %v423 = vstv %s421
    %v424 = vmul.f32 %v423, %v396
    %v425 = vmul.f32 %v423, %v397
    %v426 = vstv %s422
    %v427 = vmul.f32 %v426, %v407
    %v428 = vmul.f32 %v426, %v408
    %v429 = vadd.f32 %v424, %v427
    %v430 = vadd.f32 %v425, %v428
    %v431 = vadd.f32 %v311, %v429
    %v432 = vadd.f32 %v312, %v430
    %s433 = sld [smem:[#allocation2 + $0x10]]
    %s434 = sld [smem:[#allocation2 + $0x41]]
    %v435 = vstv %s433
    %v436 = vmul.f32 %v435, %v396
    %v437 = vmul.f32 %v435, %v397
    %v438 = vstv %s434
    %v439 = vmul.f32 %v438, %v407
    %v440 = vmul.f32 %v438, %v408
    %v441 = vadd.f32 %v436, %v439
    %v442 = vadd.f32 %v437, %v440
    %v443 = vadd.f32 %v323, %v441
    %v444 = vadd.f32 %v324, %v442
    %s445 = sld [smem:[#allocation2 + $0x11]]
    %s446 = sld [smem:[#allocation2 + $0x42]]
    %v447 = vstv %s445
    %v448 = vmul.f32 %v447, %v396
    %v449 = vmul.f32 %v447, %v397
    %v450 = vstv %s446
    %v451 = vmul.f32 %v450, %v407
    %v452 = vmul.f32 %v450, %v408
    %v453 = vadd.f32 %v448, %v451
    %v454 = vadd.f32 %v449, %v452
    %v455 = vadd.f32 %v335, %v453
    %v456 = vadd.f32 %v336, %v454
    %s457 = sld [smem:[#allocation2 + $0x12]]
    %s458 = sld [smem:[#allocation2 + $0x43]]
    %v459 = vstv %s457
    %v460 = vmul.f32 %v459, %v396
    %v461 = vmul.f32 %v459, %v397
    %v462 = vstv %s458
    %v463 = vmul.f32 %v462, %v407
    %v464 = vmul.f32 %v462, %v408
    %v465 = vadd.f32 %v460, %v463
    %v466 = vadd.f32 %v461, %v464
    %v467 = vadd.f32 %v347, %v465
    %v468 = vadd.f32 %v348, %v466
    %s469 = sld [smem:[#allocation2 + $0x13]]
    %s470 = sld [smem:[#allocation2 + $0x44]]
    %v471 = vstv %s469
    %v472 = vmul.f32 %v471, %v396
    %v473 = vmul.f32 %v471, %v397
    %v474 = vstv %s470
    %v475 = vmul.f32 %v474, %v407
    %v476 = vmul.f32 %v474, %v408
    %v477 = vadd.f32 %v472, %v475
    %v478 = vadd.f32 %v473, %v476
    %v479 = vadd.f32 %v359, %v477
    %v480 = vadd.f32 %v360, %v478
    %s481 = sld [smem:[#allocation2 + $0x14]]
    %s482 = sld [smem:[#allocation2 + $0x45]]
    %v483 = vstv %s481
    %v484 = vmul.f32 %v483, %v396
    %v485 = vmul.f32 %v483, %v397
    %v486 = vstv %s482
    %v487 = vmul.f32 %v486, %v407
    %v488 = vmul.f32 %v486, %v408
    %v489 = vadd.f32 %v484, %v487
    %v490 = vadd.f32 %v485, %v488
    %v491 = vadd.f32 %v371, %v489
    %v492 = vadd.f32 %v372, %v490
    %s493 = sld [smem:[#allocation2 + $0x15]]
    %s494 = sld [smem:[#allocation2 + $0x46]]
    %v495 = vstv %s493
    %v496 = vmul.f32 %v495, %v131
    %v497 = vmul.f32 %v495, %v132
    %v498 = vmul.f32 %v495, %v133
    %v499 = vmul.f32 %v495, %v134
    %v500 = vstv %s494
    %v501 = vmul.f32 %v500, %v109
    %v502 = vmul.f32 %v500, %v116
    %v503 = vmul.f32 %v500, %v123
    %v504 = vmul.f32 %v500, %v130
    %v505 = vadd.f32 %v496, %v501
    %v506 = vadd.f32 %v497, %v502
    %v507 = vadd.f32 %v498, %v503
    %v508 = vadd.f32 %v499, %v504
    %v513 = vsel %vm138, %v507, %v505
    %v514 = vsel %vm138, %v508, %v506
    %v517 = vadd.f32 %v419, %v513
    %v518 = vadd.f32 %v420, %v514
    %s519 = sld [smem:[#allocation2 + $0x16]]
    %s520 = sld [smem:[#allocation2 + $0x47]]
    %v521 = vstv %s519
    %v522 = vmul.f32 %v521, %v131
    %v523 = vmul.f32 %v521, %v132
    %v524 = vmul.f32 %v521, %v133
    %v525 = vmul.f32 %v521, %v134
    %v526 = vstv %s520
    %v527 = vmul.f32 %v526, %v109
    %v528 = vmul.f32 %v526, %v116
    %v529 = vmul.f32 %v526, %v123
    %v530 = vmul.f32 %v526, %v130
    %v531 = vadd.f32 %v522, %v527
    %v532 = vadd.f32 %v523, %v528
    %v533 = vadd.f32 %v524, %v529
    %v534 = vadd.f32 %v525, %v530
    %v539 = vsel %vm138, %v533, %v531
    %v540 = vsel %vm138, %v534, %v532
    %v543 = vadd.f32 %v431, %v539
    %v544 = vadd.f32 %v432, %v540
    %s545 = sld [smem:[#allocation2 + $0x17]]
    %s546 = sld [smem:[#allocation2 + $0x48]]
    %v547 = vstv %s545
    %v548 = vmul.f32 %v547, %v131
    %v549 = vmul.f32 %v547, %v132
    %v550 = vmul.f32 %v547, %v133
    %v551 = vmul.f32 %v547, %v134
    %v552 = vstv %s546
    %v553 = vmul.f32 %v552, %v109
    %v554 = vmul.f32 %v552, %v116
    %v555 = vmul.f32 %v552, %v123
    %v556 = vmul.f32 %v552, %v130
    %v557 = vadd.f32 %v548, %v553
    %v558 = vadd.f32 %v549, %v554
    %v559 = vadd.f32 %v550, %v555
    %v560 = vadd.f32 %v551, %v556
    %v565 = vsel %vm138, %v559, %v557
    %v566 = vsel %vm138, %v560, %v558
    %v569 = vadd.f32 %v443, %v565
    %v570 = vadd.f32 %v444, %v566
    %s571 = sld [smem:[#allocation2 + $0x18]]
    %s572 = sld [smem:[#allocation2 + $0x49]]
    %v573 = vstv %s571
    %v574 = vmul.f32 %v573, %v131
    %v575 = vmul.f32 %v573, %v132
    %v576 = vmul.f32 %v573, %v133
    %v577 = vmul.f32 %v573, %v134
    %v578 = vstv %s572
    %v579 = vmul.f32 %v578, %v109
    %v580 = vmul.f32 %v578, %v116
    %v581 = vmul.f32 %v578, %v123
    %v582 = vmul.f32 %v578, %v130
    %v583 = vadd.f32 %v574, %v579
    %v584 = vadd.f32 %v575, %v580
    %v585 = vadd.f32 %v576, %v581
    %v586 = vadd.f32 %v577, %v582
    %v591 = vsel %vm138, %v585, %v583
    %v592 = vsel %vm138, %v586, %v584
    %v595 = vadd.f32 %v455, %v591
    %v596 = vadd.f32 %v456, %v592
    %s597 = sld [smem:[#allocation2 + $0x19]]
    %s598 = sld [smem:[#allocation2 + $0x4a]]
    %v599 = vstv %s597
    %v600 = vmul.f32 %v599, %v131
    %v601 = vmul.f32 %v599, %v132
    %v602 = vmul.f32 %v599, %v133
    %v603 = vmul.f32 %v599, %v134
    %v604 = vstv %s598
    %v605 = vmul.f32 %v604, %v109
    %v606 = vmul.f32 %v604, %v116
    %v607 = vmul.f32 %v604, %v123
    %v608 = vmul.f32 %v604, %v130
    %v609 = vadd.f32 %v600, %v605
    %v610 = vadd.f32 %v601, %v606
    %v611 = vadd.f32 %v602, %v607
    %v612 = vadd.f32 %v603, %v608
    %v617 = vsel %vm138, %v611, %v609
    %v618 = vsel %vm138, %v612, %v610
    %v621 = vadd.f32 %v467, %v617
    %v622 = vadd.f32 %v468, %v618
    %s623 = sld [smem:[#allocation2 + $0x1a]]
    %s624 = sld [smem:[#allocation2 + $0x4b]]
    %v625 = vstv %s623
    %v626 = vmul.f32 %v625, %v131
    %v627 = vmul.f32 %v625, %v132
    %v628 = vmul.f32 %v625, %v133
    %v629 = vmul.f32 %v625, %v134
    %v630 = vstv %s624
    %v631 = vmul.f32 %v630, %v109
    %v632 = vmul.f32 %v630, %v116
    %v633 = vmul.f32 %v630, %v123
    %v634 = vmul.f32 %v630, %v130
    %v635 = vadd.f32 %v626, %v631
    %v636 = vadd.f32 %v627, %v632
    %v637 = vadd.f32 %v628, %v633
    %v638 = vadd.f32 %v629, %v634
    %v643 = vsel %vm138, %v637, %v635
    %v644 = vsel %vm138, %v638, %v636
    %v647 = vadd.f32 %v479, %v643
    %v648 = vadd.f32 %v480, %v644
    %s649 = sld [smem:[#allocation2 + $0x1b]]
    %s650 = sld [smem:[#allocation2 + $0x4c]]
    %v651 = vstv %s649
    %v652 = vmul.f32 %v651, %v131
    %v653 = vmul.f32 %v651, %v132
    %v654 = vmul.f32 %v651, %v133
    %v655 = vmul.f32 %v651, %v134
    %v656 = vstv %s650
    %v657 = vmul.f32 %v656, %v109
    %v658 = vmul.f32 %v656, %v116
    %v659 = vmul.f32 %v656, %v123
    %v660 = vmul.f32 %v656, %v130
    %v661 = vadd.f32 %v652, %v657
    %v662 = vadd.f32 %v653, %v658
    %v663 = vadd.f32 %v654, %v659
    %v664 = vadd.f32 %v655, %v660
    %v669 = vsel %vm138, %v663, %v661
    %v670 = vsel %vm138, %v664, %v662
    %v673 = vadd.f32 %v491, %v669
    %v674 = vadd.f32 %v492, %v670
    %s675 = scalar_lea.vmem [#allocation6], 4
    %v676 = vld [vmem:[%s675] ss:$8 sm:$0x3]
    %677 = vrot.lane.b32.xlu0 %v145, 112
    %v678 = vpop.permute.xlu0 %677
    %679 = vrot.lane.b32.xlu0 %v139, 112
    %v680 = vpop.permute.xlu0 %679
    %vm681 = vcmask 916480
    %v682 = vsel %vm681, %v678, %v680
    %v686 = vsel %vm681, %v680, %v678
    %v688 = vlaneseq
    %v689 = vshrl.u32 %v688, 7
    %v690 = vsub.s32 0, %v689
    %v691 = vrot.slane %v676, %v690
    %v692 = vlaneseq
    %v693 = vshrl.u32 %v692, 7
    %v694 = vsub.s32 1, %v693
    %v695 = vrot.slane %v676, %v694
    %v698 = vmul.f32 %v682, %v691
    %v699 = vmul.f32 %v686, %v695
    %700 = vrot.lane.b32.xlu0 %v174, 112
    %v701 = vpop.permute.xlu0 %700
    %702 = vrot.lane.b32.xlu0 %v168, 112
    %v703 = vpop.permute.xlu0 %702
    %v704 = vsel %vm681, %v701, %v703
    %v708 = vsel %vm681, %v703, %v701
    %v709 = vmul.f32 %v704, %v691
    %v710 = vmul.f32 %v708, %v695
    %s711 = sld [smem:[#allocation2 + $0x1c]]
    %s712 = sld [smem:[#allocation2 + $0x4d]]
    %v713 = vstv %s711
    %v714 = vmul.f32 %v713, %v698
    %v715 = vmul.f32 %v713, %v699
    %v716 = vstv %s712
    %v717 = vmul.f32 %v716, %v709
    %v718 = vmul.f32 %v716, %v710
    %v719 = vadd.f32 %v714, %v717
    %v720 = vadd.f32 %v715, %v718
    %v721 = vadd.f32 %v517, %v719
    %v722 = vadd.f32 %v518, %v720
    %s723 = sld [smem:[#allocation2 + $0x1d]]
    %s724 = sld [smem:[#allocation2 + $0x4e]]
    %v725 = vstv %s723
    %v726 = vmul.f32 %v725, %v698
    %v727 = vmul.f32 %v725, %v699
    %v728 = vstv %s724
    %v729 = vmul.f32 %v728, %v709
    %v730 = vmul.f32 %v728, %v710
    %v731 = vadd.f32 %v726, %v729
    %v732 = vadd.f32 %v727, %v730
    %v733 = vadd.f32 %v543, %v731
    %v734 = vadd.f32 %v544, %v732
    %s735 = sld [smem:[#allocation2 + $0x1e]]
    %s736 = sld [smem:[#allocation2 + $0x4f]]
    %v737 = vstv %s735
    %v738 = vmul.f32 %v737, %v698
    %v739 = vmul.f32 %v737, %v699
    %v740 = vstv %s736
    %v741 = vmul.f32 %v740, %v709
    %v742 = vmul.f32 %v740, %v710
    %v743 = vadd.f32 %v738, %v741
    %v744 = vadd.f32 %v739, %v742
    %v745 = vadd.f32 %v569, %v743
    %v746 = vadd.f32 %v570, %v744
    %s747 = sld [smem:[#allocation2 + $0x1f]]
    %s748 = sld [smem:[#allocation2 + $0x50]]
    %v749 = vstv %s747
    %v750 = vmul.f32 %v749, %v698
    %v751 = vmul.f32 %v749, %v699
    %v752 = vstv %s748
    %v753 = vmul.f32 %v752, %v709
    %v754 = vmul.f32 %v752, %v710
    %v755 = vadd.f32 %v750, %v753
    %v756 = vadd.f32 %v751, %v754
    %v757 = vadd.f32 %v595, %v755
    %v758 = vadd.f32 %v596, %v756
    %s759 = sld [smem:[#allocation2 + $0x20]]
    %s760 = sld [smem:[#allocation2 + $0x51]]
    %v761 = vstv %s759
    %v762 = vmul.f32 %v761, %v698
    %v763 = vmul.f32 %v761, %v699
    %v764 = vstv %s760
    %v765 = vmul.f32 %v764, %v709
    %v766 = vmul.f32 %v764, %v710
    %v767 = vadd.f32 %v762, %v765
    %v768 = vadd.f32 %v763, %v766
    %v769 = vadd.f32 %v621, %v767
    %v770 = vadd.f32 %v622, %v768
    %s771 = sld [smem:[#allocation2 + $0x21]]
    %s772 = sld [smem:[#allocation2 + $0x52]]
    %v773 = vstv %s771
    %v774 = vmul.f32 %v773, %v698
    %v775 = vmul.f32 %v773, %v699
    %v776 = vstv %s772
    %v777 = vmul.f32 %v776, %v709
    %v778 = vmul.f32 %v776, %v710
    %v779 = vadd.f32 %v774, %v777
    %v780 = vadd.f32 %v775, %v778
    %v781 = vadd.f32 %v647, %v779
    %v782 = vadd.f32 %v648, %v780
    %s783 = sld [smem:[#allocation2 + $0x22]]
    %s784 = sld [smem:[#allocation2 + $0x53]]
    %v785 = vstv %s783
    %v786 = vmul.f32 %v785, %v698
    %v787 = vmul.f32 %v785, %v699
    %v788 = vstv %s784
    %v789 = vmul.f32 %v788, %v709
    %v790 = vmul.f32 %v788, %v710
    %v791 = vadd.f32 %v786, %v789
    %v792 = vadd.f32 %v787, %v790
    %v793 = vadd.f32 %v673, %v791
    %v794 = vadd.f32 %v674, %v792
    %s795 = scalar_lea.vmem [#allocation6], 5
    %v796 = vld [vmem:[%s795] ss:$8 sm:$0x3]
    %797 = vrot.lane.b32.xlu0 %v145, 96
    %v798 = vpop.permute.xlu0 %797
    %799 = vrot.lane.b32.xlu0 %v139, 96
    %v800 = vpop.permute.xlu0 %799
    %vm801 = vcmask 785408
    %v802 = vsel %vm801, %v798, %v800
    %v806 = vsel %vm801, %v800, %v798
    %v808 = vlaneseq
    %v809 = vshrl.u32 %v808, 7
    %v810 = vsub.s32 0, %v809
    %v811 = vrot.slane %v796, %v810
    %v812 = vlaneseq
    %v813 = vshrl.u32 %v812, 7
    %v814 = vsub.s32 1, %v813
    %v815 = vrot.slane %v796, %v814
    %v818 = vmul.f32 %v802, %v811
    %v819 = vmul.f32 %v806, %v815
    %820 = vrot.lane.b32.xlu0 %v174, 96
    %v821 = vpop.permute.xlu0 %820
    %822 = vrot.lane.b32.xlu0 %v168, 96
    %v823 = vpop.permute.xlu0 %822
    %v824 = vsel %vm801, %v821, %v823
    %v828 = vsel %vm801, %v823, %v821
    %v829 = vmul.f32 %v824, %v811
    %v830 = vmul.f32 %v828, %v815
    %s831 = sld [smem:[#allocation2 + $0x23]]
    %s832 = sld [smem:[#allocation2 + $0x54]]
    %v833 = vstv %s831
    %v834 = vmul.f32 %v833, %v818
    %v835 = vmul.f32 %v833, %v819
    %v836 = vstv %s832
    %v837 = vmul.f32 %v836, %v829
    %v838 = vmul.f32 %v836, %v830
    %v839 = vadd.f32 %v834, %v837
    %v840 = vadd.f32 %v835, %v838
    %v841 = vadd.f32 %v721, %v839
    %v842 = vadd.f32 %v722, %v840
    %s843 = sld [smem:[#allocation2 + $0x24]]
    %s844 = sld [smem:[#allocation2 + $0x55]]
    %v845 = vstv %s843
    %v846 = vmul.f32 %v845, %v818
    %v847 = vmul.f32 %v845, %v819
    %v848 = vstv %s844
    %v849 = vmul.f32 %v848, %v829
    %v850 = vmul.f32 %v848, %v830
    %v851 = vadd.f32 %v846, %v849
    %v852 = vadd.f32 %v847, %v850
    %v853 = vadd.f32 %v733, %v851
    %v854 = vadd.f32 %v734, %v852
    %s855 = sld [smem:[#allocation2 + $0x25]]
    %s856 = sld [smem:[#allocation2 + $0x56]]
    %v857 = vstv %s855
    %v858 = vmul.f32 %v857, %v818
    %v859 = vmul.f32 %v857, %v819
    %v860 = vstv %s856
    %v861 = vmul.f32 %v860, %v829
    %v862 = vmul.f32 %v860, %v830
    %v863 = vadd.f32 %v858, %v861
    %v864 = vadd.f32 %v859, %v862
    %v865 = vadd.f32 %v745, %v863
    %v866 = vadd.f32 %v746, %v864
    %s867 = sld [smem:[#allocation2 + $0x26]]
    %s868 = sld [smem:[#allocation2 + $0x57]]
    %v869 = vstv %s867
    %v870 = vmul.f32 %v869, %v818
    %v871 = vmul.f32 %v869, %v819
    %v872 = vstv %s868
    %v873 = vmul.f32 %v872, %v829
    %v874 = vmul.f32 %v872, %v830
    %v875 = vadd.f32 %v870, %v873
    %v876 = vadd.f32 %v871, %v874
    %v877 = vadd.f32 %v757, %v875
    %v878 = vadd.f32 %v758, %v876
    %s879 = sld [smem:[#allocation2 + $0x27]]
    %s880 = sld [smem:[#allocation2 + $0x58]]
    %v881 = vstv %s879
    %v882 = vmul.f32 %v881, %v818
    %v883 = vmul.f32 %v881, %v819
    %v884 = vstv %s880
    %v885 = vmul.f32 %v884, %v829
    %v886 = vmul.f32 %v884, %v830
    %v887 = vadd.f32 %v882, %v885
    %v888 = vadd.f32 %v883, %v886
    %v889 = vadd.f32 %v769, %v887
    %v890 = vadd.f32 %v770, %v888
    %s891 = sld [smem:[#allocation2 + $0x28]]
    %s892 = sld [smem:[#allocation2 + $0x59]]
    %v893 = vstv %s891
    %v894 = vmul.f32 %v893, %v818
    %v895 = vmul.f32 %v893, %v819
    %v896 = vstv %s892
    %v897 = vmul.f32 %v896, %v829
    %v898 = vmul.f32 %v896, %v830
    %v899 = vadd.f32 %v894, %v897
    %v900 = vadd.f32 %v895, %v898
    %v901 = vadd.f32 %v781, %v899
    %v902 = vadd.f32 %v782, %v900
    %s903 = sld [smem:[#allocation2 + $0x29]]
    %s904 = sld [smem:[#allocation2 + $0x5a]]
    %v905 = vstv %s903
    %v906 = vmul.f32 %v905, %v818
    %v907 = vmul.f32 %v905, %v819
    %v908 = vstv %s904
    %v909 = vmul.f32 %v908, %v829
    %v910 = vmul.f32 %v908, %v830
    %v911 = vadd.f32 %v906, %v909
    %v912 = vadd.f32 %v907, %v910
    %v913 = vadd.f32 %v793, %v911
    %v914 = vadd.f32 %v794, %v912
    %s915 = scalar_lea.vmem [#allocation6], 6
    %v916 = vld [vmem:[%s915] ss:$8 sm:$0x3]
    %917 = vrot.lane.b32.xlu0 %v145, 80
    %v918 = vpop.permute.xlu0 %917
    %919 = vrot.lane.b32.xlu0 %v139, 80
    %v920 = vpop.permute.xlu0 %919
    %vm921 = vcmask 654336
    %v922 = vsel %vm921, %v918, %v920
    %v926 = vsel %vm921, %v920, %v918
    %v928 = vlaneseq
    %v929 = vshrl.u32 %v928, 7
    %v930 = vsub.s32 0, %v929
    %v931 = vrot.slane %v916, %v930
    %v932 = vlaneseq
    %v933 = vshrl.u32 %v932, 7
    %v934 = vsub.s32 1, %v933
    %v935 = vrot.slane %v916, %v934
    %v938 = vmul.f32 %v922, %v931
    %v939 = vmul.f32 %v926, %v935
    %940 = vrot.lane.b32.xlu0 %v174, 80
    %v941 = vpop.permute.xlu0 %940
    %942 = vrot.lane.b32.xlu0 %v168, 80
    %v943 = vpop.permute.xlu0 %942
    %v944 = vsel %vm921, %v941, %v943
    %v948 = vsel %vm921, %v943, %v941
    %v949 = vmul.f32 %v944, %v931
    %v950 = vmul.f32 %v948, %v935
    %s951 = sld [smem:[#allocation2 + $0x2a]]
    %s952 = sld [smem:[#allocation2 + $0x5b]]
    %v953 = vstv %s951
    %v954 = vmul.f32 %v953, %v938
    %v955 = vmul.f32 %v953, %v939
    %v956 = vstv %s952
    %v957 = vmul.f32 %v956, %v949
    %v958 = vmul.f32 %v956, %v950
    %v959 = vadd.f32 %v954, %v957
    %v960 = vadd.f32 %v955, %v958
    %v961 = vadd.f32 %v841, %v959
    %v962 = vadd.f32 %v842, %v960
    %s963 = sld [smem:[#allocation2 + $0x2b]]
    %s964 = sld [smem:[#allocation2 + $0x5c]]
    %v965 = vstv %s963
    %v966 = vmul.f32 %v965, %v938
    %v967 = vmul.f32 %v965, %v939
    %v968 = vstv %s964
    %v969 = vmul.f32 %v968, %v949
    %v970 = vmul.f32 %v968, %v950
    %v971 = vadd.f32 %v966, %v969
    %v972 = vadd.f32 %v967, %v970
    %v973 = vadd.f32 %v853, %v971
    %v974 = vadd.f32 %v854, %v972
    %s975 = sld [smem:[#allocation2 + $0x2c]]
    %s976 = sld [smem:[#allocation2 + $0x5d]]
    %v977 = vstv %s975
    %v978 = vmul.f32 %v977, %v938
    %v979 = vmul.f32 %v977, %v939
    %v980 = vstv %s976
    %v981 = vmul.f32 %v980, %v949
    %v982 = vmul.f32 %v980, %v950
    %v983 = vadd.f32 %v978, %v981
    %v984 = vadd.f32 %v979, %v982
    %v985 = vadd.f32 %v865, %v983
    %v986 = vadd.f32 %v866, %v984
    %s987 = sld [smem:[#allocation2 + $0x2d]]
    %s988 = sld [smem:[#allocation2 + $0x5e]]
    %v989 = vstv %s987
    %v990 = vmul.f32 %v989, %v938
    %v991 = vmul.f32 %v989, %v939
    %v992 = vstv %s988
    %v993 = vmul.f32 %v992, %v949
    %v994 = vmul.f32 %v992, %v950
    %v995 = vadd.f32 %v990, %v993
    %v996 = vadd.f32 %v991, %v994
    %v997 = vadd.f32 %v877, %v995
    %v998 = vadd.f32 %v878, %v996
    %s999 = sld [smem:[#allocation2 + $0x2e]]
    %s1000 = sld [smem:[#allocation2 + $0x5f]]
    %v1001 = vstv %s999
    %v1002 = vmul.f32 %v1001, %v938
    %v1003 = vmul.f32 %v1001, %v939
    %v1004 = vstv %s1000
    %v1005 = vmul.f32 %v1004, %v949
    %v1006 = vmul.f32 %v1004, %v950
    %v1007 = vadd.f32 %v1002, %v1005
    %v1008 = vadd.f32 %v1003, %v1006
    %v1009 = vadd.f32 %v889, %v1007
    %v1010 = vadd.f32 %v890, %v1008
    %s1011 = sld [smem:[#allocation2 + $0x2f]]
    %s1012 = sld [smem:[#allocation2 + $0x60]]
    %v1013 = vstv %s1011
    %v1014 = vmul.f32 %v1013, %v938
    %v1015 = vmul.f32 %v1013, %v939
    %v1016 = vstv %s1012
    %v1017 = vmul.f32 %v1016, %v949
    %v1018 = vmul.f32 %v1016, %v950
    %v1019 = vadd.f32 %v1014, %v1017
    %v1020 = vadd.f32 %v1015, %v1018
    %v1021 = vadd.f32 %v901, %v1019
    %v1022 = vadd.f32 %v902, %v1020
    %s1023 = sld [smem:[#allocation2 + $0x30]]
    %s1024 = sld [smem:[#allocation2 + $0x61]]
    %v1025 = vstv %s1023
    %v1026 = vmul.f32 %v1025, %v938
    %v1027 = vmul.f32 %v1025, %v939
    %v1028 = vstv %s1024
    %v1029 = vmul.f32 %v1028, %v949
    %v1030 = vmul.f32 %v1028, %v950
    %v1031 = vadd.f32 %v1026, %v1029
    %v1032 = vadd.f32 %v1027, %v1030
    %v1033 = vadd.f32 %v913, %v1031
    %v1034 = vadd.f32 %v914, %v1032
    %v1035 = vld [vmem:[#allocation7] ss:$8 sm:$0x3]
    %1037 = vrot.lane.b32.xlu0 %v962, 3
    %v1038 = vpop.permute.xlu0 %1037
    %1041 = vrot.lane.b32.xlu0 %v961, 3
    %v1042 = vpop.permute.xlu0 %1041
    %vm1043 = vcmask 23552
    %v1044 = vsel %vm1043, %v1042, %v1038
    %v1047 = vsel %vm1043, %v1038, %v1042
    %v1049 = vlaneseq
    %v1050 = vshrl.u32 %v1049, 7
    %v1051 = vsub.s32 0, %v1050
    %v1052 = vrot.slane %v1035, %v1051
    %v1053 = vlaneseq
    %v1054 = vshrl.u32 %v1053, 7
    %v1055 = vsub.s32 1, %v1054
    %v1056 = vrot.slane %v1035, %v1055
    %v1059 = vmul.f32 %v1047, %v1052
    %v1060 = vmul.f32 %v1044, %v1056
    %s1061 = scalar_lea.vmem [#allocation7], 1
    %v1062 = vld [vmem:[%s1061] ss:$8 sm:$0x3]
    %1064 = vrot.lane.b32.xlu0 %v974, 2
    %v1065 = vpop.permute.xlu0 %1064
    %1068 = vrot.lane.b32.xlu0 %v973, 2
    %v1069 = vpop.permute.xlu0 %1068
    %vm1070 = vcmask 15360
    %v1071 = vsel %vm1070, %v1069, %v1065
    %v1074 = vsel %vm1070, %v1065, %v1069
    %v1076 = vlaneseq
    %v1077 = vshrl.u32 %v1076, 7
    %v1078 = vsub.s32 0, %v1077
    %v1079 = vrot.slane %v1062, %v1078
    %v1080 = vlaneseq
    %v1081 = vshrl.u32 %v1080, 7
    %v1082 = vsub.s32 1, %v1081
    %v1083 = vrot.slane %v1062, %v1082
    %v1086 = vmul.f32 %v1074, %v1079
    %v1087 = vmul.f32 %v1071, %v1083
    %v1088 = vadd.f32 %v1059, %v1086
    %v1089 = vadd.f32 %v1060, %v1087
    %s1090 = scalar_lea.vmem [#allocation7], 2
    %v1091 = vld [vmem:[%s1090] ss:$8 sm:$0x3]
    %1093 = vrot.lane.b32.xlu0 %v986, 1
    %v1094 = vpop.permute.xlu0 %1093
    %1097 = vrot.lane.b32.xlu0 %v985, 1
    %v1098 = vpop.permute.xlu0 %1097
    %vm1099 = vcmask 7168
    %v1100 = vsel %vm1099, %v1098, %v1094
    %v1103 = vsel %vm1099, %v1094, %v1098
    %v1105 = vlaneseq
    %v1106 = vshrl.u32 %v1105, 7
    %v1107 = vsub.s32 0, %v1106
    %v1108 = vrot.slane %v1091, %v1107
    %v1109 = vlaneseq
    %v1110 = vshrl.u32 %v1109, 7
    %v1111 = vsub.s32 1, %v1110
    %v1112 = vrot.slane %v1091, %v1111
    %v1115 = vmul.f32 %v1103, %v1108
    %v1116 = vmul.f32 %v1100, %v1112
    %v1117 = vadd.f32 %v1088, %v1115
    %v1118 = vadd.f32 %v1089, %v1116
    %v1119 = vadd.f32 %v1117, %v997
    %v1120 = vadd.f32 %v1118, %v998
    %s1121 = scalar_lea.vmem [#allocation7], 4
    %v1122 = vld [vmem:[%s1121] ss:$8 sm:$0x3]
    %1125 = vrot.lane.b32.xlu0 %v1009, 127
    %v1126 = vpop.permute.xlu0 %1125
    %1127 = vrot.lane.b32.xlu0 %v1010, 127
    %v1128 = vpop.permute.xlu0 %1127
    %vm1129 = vcmask 1039360
    %v1130 = vsel %vm1129, %v1126, %v1128
    %v1134 = vsel %vm1129, %v1128, %v1126
    %v1136 = vlaneseq
    %v1137 = vshrl.u32 %v1136, 7
    %v1138 = vsub.s32 0, %v1137
    %v1139 = vrot.slane %v1122, %v1138
    %v1140 = vlaneseq
    %v1141 = vshrl.u32 %v1140, 7
    %v1142 = vsub.s32 1, %v1141
    %v1143 = vrot.slane %v1122, %v1142
    %v1146 = vmul.f32 %v1130, %v1139
    %v1147 = vmul.f32 %v1134, %v1143
    %v1148 = vadd.f32 %v1119, %v1146
    %v1149 = vadd.f32 %v1120, %v1147
    %s1150 = scalar_lea.vmem [#allocation7], 5
    %v1151 = vld [vmem:[%s1150] ss:$8 sm:$0x3]
    %1154 = vrot.lane.b32.xlu0 %v1021, 126
    %v1155 = vpop.permute.xlu0 %1154
    %1156 = vrot.lane.b32.xlu0 %v1022, 126
    %v1157 = vpop.permute.xlu0 %1156
    %vm1158 = vcmask 1031168
    %v1159 = vsel %vm1158, %v1155, %v1157
    %v1163 = vsel %vm1158, %v1157, %v1155
    %v1165 = vlaneseq
    %v1166 = vshrl.u32 %v1165, 7
    %v1167 = vsub.s32 0, %v1166
    %v1168 = vrot.slane %v1151, %v1167
    %v1169 = vlaneseq
    %v1170 = vshrl.u32 %v1169, 7
    %v1171 = vsub.s32 1, %v1170
    %v1172 = vrot.slane %v1151, %v1171
    %v1175 = vmul.f32 %v1159, %v1168
    %v1176 = vmul.f32 %v1163, %v1172
    %v1177 = vadd.f32 %v1148, %v1175
    %v1178 = vadd.f32 %v1149, %v1176
    %s1179 = scalar_lea.vmem [#allocation7], 6
    %v1180 = vld [vmem:[%s1179] ss:$8 sm:$0x3]
    %1183 = vrot.lane.b32.xlu0 %v1033, 125
    %v1184 = vpop.permute.xlu0 %1183
    %1185 = vrot.lane.b32.xlu0 %v1034, 125
    %v1186 = vpop.permute.xlu0 %1185
    %vm1187 = vcmask 1022976
    %v1188 = vsel %vm1187, %v1184, %v1186
    %v1192 = vsel %vm1187, %v1186, %v1184
    %v1194 = vlaneseq
    %v1195 = vshrl.u32 %v1194, 7
    %v1196 = vsub.s32 0, %v1195
    %v1197 = vrot.slane %v1180, %v1196
    %v1198 = vlaneseq
    %v1199 = vshrl.u32 %v1198, 7
    %v1200 = vsub.s32 1, %v1199
    %v1201 = vrot.slane %v1180, %v1200
    %v1204 = vmul.f32 %v1188, %v1197
    %v1205 = vmul.f32 %v1192, %v1201
    %v1206 = vadd.f32 %v1177, %v1204
    %v1207 = vadd.f32 %v1178, %v1205
    %v1208 = vxor.u32 %v1206, 2147483648
    %v1209 = vxor.u32 %v1207, 2147483648
    %v1210 = vmul.f32 %v1208, 1.442695
    %v1211 = vpow.pop %v1210
    %v1212 = vmul.f32 %v1209, 1.442695
    %v1213 = vpow.pop %v1212
    %v1214 = vadd.f32 %v1211, 1.0
    %v1215 = vadd.f32 %v1213, 1.0
    %v1216 = vrcp.pop %v1214
    %v1217 = vmul.f32 1.0, %v1216
    %v1218 = vrcp.pop %v1215
    %v1219 = vmul.f32 1.0, %v1218
    %v1222 = vcombine.low %v1217, %v1219
    %v1224 = vunpack.c.l.s4 1966171168
    %v1225 = vunpack.c.0.s8 %v1224
    %v1226 = vlaneseq
    %v1227 = vshrl.u32 %v1226, 7
    %v1228 = vsub.s32 %v1225, %v1227
    %v1229 = vrot.slane %v1222, %v1228
    %v1230 = vcombine.high %v1229, %v1229
    %v1232 = vunpack.c.l.s4 1966171168
    %v1233 = vunpack.c.0.s8 %v1232
    %v1234 = vlaneseq
    %v1235 = vshrl.u32 %v1234, 7
    %v1236 = vsub.s32 %v1233, %v1235
    %v1237 = vrot.slane %v1229, %v1236
    %v1239 = vunpack.c.l.s4 1966171168
    %v1240 = vunpack.c.0.s8 %v1239
    %v1241 = vlaneseq
    %v1242 = vshrl.u32 %v1241, 7
    %v1243 = vsub.s32 %v1240, %v1242
    %v1244 = vrot.slane %v1230, %v1243
    %v1247 = vlaneseq
    %vm1248 = vcmp.ge.s32.totalorder %v1247, 0
    %vm1249 = vcmp.lt.s32.totalorder %v1247, 256
    %vm1250 = vmand %vm1248, %vm1249
    %1251 = vst.msk [vmem:[#allocation10] sm:$0x3] %vm1250, %v1237
    %1252 = vst.msk [vmem:[#allocation10 + $0x2] sm:$0x3] %vm1250, %v1244
    // Predicated region
    $region34: #{tpu_custom_call.1} parent=1 // pred_check
      _
    $region35: #{tpu_custom_call.1} parent=1 // pred_check_branch
      %1254 = sbr.rel (0) target = $region37
    $region36: #{tpu_custom_call.1} parent=1 // pred_region
      %s1256 = ssub.s32 64, 64
      %1257 = vsyncadd [#allocation4], %s1256
      %s1258 = sshll.u32 [#allocation10], 4
      %s1259 = int_to_ptr.vmem [resolvable:$true] %s1258
      %1264 = dma.vmem_to_hbm [thread:$0]  %s1259, 64, %s4, [#allocation4], 32, 32, 2
    $region37: #{tpu_custom_call.1} parent=1 // pred_fallthru
      _
    // Predicated region
    $region38: #{tpu_custom_call.1} parent=1 // pred_check
      _
    $region39: #{tpu_custom_call.1} parent=1 // pred_check_branch
      %1266 = sbr.rel (0) target = $region41
    $region40: #{tpu_custom_call.1} parent=1 // pred_region
      %1267 = dma.done [#allocation4], 64
    $region41: #{tpu_custom_call.1} parent=1 // pred_fallthru
      _
    %1268 = vsyncpa [#allocation3], 1
    %1269 = vsyncpa [#allocation8], 1
    %1270 = vsyncpa [#allocation4], 1
    %1271 = vsyncpa [#allocation5], 1

</llo_original>
